<compile_context>
chip_gen: v6e
topology: v6e:2x2x1
jax: 0.10.0
libtpu: 0.0.40
codegen_flags: <defaults>
</compile_context>

<pallas_src>
import jax
import jax.numpy as jnp
from jax.experimental import pallas as pl
from jax.experimental.pallas import tpu as pltpu


# --------------------------------------------------------------------------- #
# Kernels
# --------------------------------------------------------------------------- #
def _attention_kernel_resident(x_ref, wk_ref, bk_ref, wa_ref, ba_ref,
                               wv_ref, bv_ref, o_ref):
    """1-D grid over batch tiles; Wk/Wv fully resident in VMEM."""
    x = x_ref[...]
    xm = x.astype(wk_ref.dtype)  # bf16 cast for the MXU when weights are bf16 (no-op for f32)

    # keys = tanh(x @ Wk + bk)         (MXU, f32 accumulate; tanh in f32 on VPU/EUP)
    keys = jnp.tanh(
        jnp.dot(xm, wk_ref[...], preferred_element_type=jnp.float32) + bk_ref[...])
    # values = x @ Wv + bv             (MXU, f32 accumulate)
    values = jnp.dot(xm, wv_ref[...], preferred_element_type=jnp.float32) + bv_ref[...]
    # scores = keys @ Wa + ba : width-1 matmul done as VPU multiply + lane reduce
    # (keeps the MXU free); ba is a scalar read from SMEM.
    scores = jnp.sum(keys * wa_ref[...], axis=-1, keepdims=True) + ba_ref[0]
    attn = jax.nn.sigmoid(scores)

    o_ref[...] = (x.astype(jnp.float32) + values * attn).astype(o_ref.dtype)


def _attention_kernel_coltiled(x_full_ref, x_col_ref, wk_ref, bk_ref, wa_ref, ba_ref,
                               wv_ref, bv_ref, o_ref, attn_ref):
    """2-D grid (batch tiles x Wv-column tiles) for large D (v7x 64 MiB VMEM)."""
    j = pl.program_id(1)
    xm = x_full_ref[...].astype(wk_ref.dtype)

    # The attention gate depends only on the row tile: compute it once per row tile
    # (first column step) and stash it in VMEM scratch for the remaining steps.
    @pl.when(j == 0)
    def _():
        keys = jnp.tanh(
            jnp.dot(xm, wk_ref[...], preferred_element_type=jnp.float32) + bk_ref[...])
        scores = jnp.sum(keys * wa_ref[...], axis=-1, keepdims=True) + ba_ref[0]
        attn_ref[...] = jax.nn.sigmoid(scores)

    values = jnp.dot(xm, wv_ref[...], preferred_element_type=jnp.float32) + bv_ref[...]
    o_ref[...] = (x_col_ref[...].astype(jnp.float32)
                  + values * attn_ref[...]).astype(o_ref.dtype)


# --------------------------------------------------------------------------- #
# Spec helpers
# --------------------------------------------------------------------------- #
def _round_up(n, m):
    return ((n + m - 1) // m) * m


_USE_BUFFERED = True  # optimistically try single-buffered resident weights


def _resident_block_spec(shape, index_map, buffered):
    """Full-shape block with constant index_map -> stays resident in VMEM across
    grid steps. When `buffered`, request a single pipeline buffer (a constant-index
    block is never re-fetched, so the second buffer is pure VMEM waste)."""
    if buffered:
        return pl.BlockSpec(shape, index_map, pipeline_mode=pl.Buffered(1))
    return pl.BlockSpec(shape, index_map)


def _run_with_buffer_fallback(build):
    """build(buffered: bool) -> output. Try single-buffered resident weights first;
    fall back to Pallas's default double buffering if this jax rejects it."""
    global _USE_BUFFERED
    if _USE_BUFFERED:
        try:
            return build(True)
        except Exception:  # pipeline_mode / Buffered(1) unsupported -> fall back
            _USE_BUFFERED = False
    return build(False)


def _vmem_capacity_bytes():
    try:
        return int(pltpu.get_tpu_info().vmem_capacity_bytes)
    except Exception:
        return 64 << 20  # conservative default (v7x per-core VMEM)


# --------------------------------------------------------------------------- #
# One-time parameter preparation (hoisted out of the per-call hot path)
# --------------------------------------------------------------------------- #
def prepare_params(params, *, weight_dtype=jnp.float32):
    """Pad the key dim to a lane-dense multiple of 128, lay weights out as
    (in, out) so the kernel does plain x @ W, optionally cast the matmul weights
    to bf16. Call once at init / parameter-update time, NOT per forward call."""
    wk = jnp.asarray(params["wk"], jnp.float32)      # (D, K)
    wv = jnp.asarray(params["wv"], jnp.float32)      # (D, D)
    D, K = wk.shape
    K_pad = _round_up(K, 128)
    return {
        "D": D,
        "K_pad": K_pad,
        "wk": jnp.pad(wk, ((0, 0), (0, K_pad - K))).astype(weight_dtype),
        "bk": jnp.pad(jnp.asarray(params["bk"], jnp.float32).reshape(1, K),
                      ((0, 0), (0, K_pad - K))),
        "wa": jnp.pad(jnp.asarray(params["wa"], jnp.float32).reshape(1, K),
                      ((0, 0), (0, K_pad - K))),
        "ba": jnp.asarray(params["ba"], jnp.float32).reshape(1),
        "wv": wv.astype(weight_dtype),
        "bv": jnp.asarray(params["bv"], jnp.float32).reshape(1, D),
    }


# --------------------------------------------------------------------------- #
# Forward wrapper
# --------------------------------------------------------------------------- #
def attention_module(x, prepared, *, tile_b=512, tile_n=None):
    """x: (B, input_dim). prepared: output of prepare_params(). Returns (B, input_dim)."""
    B, D = x.shape
    assert D == prepared["D"], (D, prepared["D"])
    K_pad = prepared["K_pad"]
    wk, bk, wa, ba = prepared["wk"], prepared["bk"], prepared["wa"], prepared["ba"]
    wv, bv = prepared["wv"], prepared["bv"]

    wbytes = wk.dtype.itemsize
    xbytes = x.dtype.itemsize
    wfac = 1 if _USE_BUFFERED else 2          # weight blocks: single- vs double-buffered

    # Generation-aware VMEM budget (v7x: 64 MiB/core, v5e/v6e: 128 MiB), with
    # headroom left for compiler internal scratch.
    vmem_cap = _vmem_capacity_bytes()
    tile_budget = max(vmem_cap - (24 << 20), vmem_cap // 2)

    def est_resident(tb):
        weights = wfac * ((D * K_pad + D * D) * wbytes + (2 * K_pad + D) * 4)
        tiles = 2 * 2 * tb * D * xbytes                # x + out, double-buffered
        interm = tb * (K_pad + D + 1) * 4              # keys, values, attn (f32)
        if wk.dtype != x.dtype:
            interm += tb * D * wbytes                  # bf16 copy of x for the MXU
        return weights + tiles + interm

    # Batch tile: multiple of 8; >=2 grid steps when the batch allows (so the
    # "parallel" axis can shard across v7x's two TensorCores); shrink to fit VMEM.
    TILE_B = min(tile_b, _round_up(B, 8))
    if B > 8 and pl.cdiv(B, TILE_B) < 2:
        TILE_B = max(8, _round_up(pl.cdiv(B, 2), 8))
    while TILE_B > 8 and est_resident(TILE_B) > tile_budget:
        TILE_B = max(8, _round_up(TILE_B // 2, 8))     # preserve multiple-of-8

    force_coltiled = tile_n is not None and tile_n < D
    use_coltiled = force_coltiled or est_resident(TILE_B) > tile_budget
    out_shape = jax.ShapeDtypeStruct((B, D), x.dtype)

    if not use_coltiled:
        # ----------------- resident-Wv path (common case) ----------------- #
        est = est_resident(TILE_B)
        vmem_limit = int(min(vmem_cap - (8 << 20), max(est + (16 << 20), 32 << 20)))
        grid = (pl.cdiv(B, TILE_B),)                   # ragged last tile handled by Pallas

        def build(buffered):
            return pl.pallas_call(
                _attention_kernel_resident,
                out_shape=out_shape,
                grid=grid,
                in_specs=[
                    pl.BlockSpec((TILE_B, D), lambda i: (i, 0)),               # x
                    _resident_block_spec((D, K_pad), lambda i: (0, 0), buffered),  # Wk
                    _resident_block_spec((1, K_pad), lambda i: (0, 0), buffered),  # bk
                    _resident_block_spec((1, K_pad), lambda i: (0, 0), buffered),  # Wa (row)
                    pl.BlockSpec(memory_space=pltpu.MemorySpace.SMEM),         # ba (scalar)
                    _resident_block_spec((D, D), lambda i: (0, 0), buffered),  # Wv
                    _resident_block_spec((1, D), lambda i: (0, 0), buffered),  # bv
                ],
                out_specs=pl.BlockSpec((TILE_B, D), lambda i: (i, 0)),
                compiler_params=pltpu.CompilerParams(
                    dimension_semantics=("parallel",),
                    vmem_limit_bytes=vmem_limit,
                ),
            )(x, wk, bk, wa, ba, wv, bv)

        return _run_with_buffer_fallback(build)

    # ------------- column-tiled Wv path (large D / forced tile_n) ------------- #
    TILE_N = tile_n if tile_n is not None else 512
    TILE_N = max(128, min(_round_up(TILE_N, 128), _round_up(D, 128)))

    def est_col(tb, tn):
        weights = wfac * (D * K_pad * wbytes + 2 * K_pad * 4)     # resident Wk/bk/Wa
        streamed = 2 * (D * tn * wbytes + tn * 4)                 # Wv/bv column tiles (x2 buffers)
        tiles = 2 * tb * D * xbytes + 2 * 2 * tb * tn * xbytes    # x full + x col + out
        interm = tb * (K_pad + tn + 1) * 4
        if wk.dtype != x.dtype:
            interm += tb * D * wbytes
        return weights + streamed + tiles + interm

    while TILE_N > 128 and est_col(TILE_B, TILE_N) > tile_budget:
        TILE_N = max(128, _round_up(TILE_N // 2, 128))
    while TILE_B > 8 and est_col(TILE_B, TILE_N) > tile_budget:
        TILE_B = max(8, _round_up(TILE_B // 2, 8))

    est = est_col(TILE_B, TILE_N)
    vmem_limit = int(min(vmem_cap - (8 << 20), max(est + (16 << 20), 32 << 20)))
    grid = (pl.cdiv(B, TILE_B), pl.cdiv(D, TILE_N))

    def build(buffered):
        return pl.pallas_call(
            _attention_kernel_coltiled,
            out_shape=out_shape,
            grid=grid,
            in_specs=[
                pl.BlockSpec((TILE_B, D), lambda i, j: (i, 0)),          # x, full width (revisited over j)
                pl.BlockSpec((TILE_B, TILE_N), lambda i, j: (i, j)),     # x, column tile (residual)
                _resident_block_spec((D, K_pad), lambda i, j: (0, 0), buffered),   # Wk
                _resident_block_spec((1, K_pad), lambda i, j: (0, 0), buffered),   # bk
                _resident_block_spec((1, K_pad), lambda i, j: (0, 0), buffered),   # Wa
                pl.BlockSpec(memory_space=pltpu.MemorySpace.SMEM),       # ba (scalar)
                pl.BlockSpec((D, TILE_N), lambda i, j: (0, j)),          # Wv column tile
                pl.BlockSpec((1, TILE_N), lambda i, j: (0, j)),          # bv column tile
            ],
            out_specs=pl.BlockSpec((TILE_B, TILE_N), lambda i, j: (i, j)),
            scratch_shapes=[pltpu.VMEM((TILE_B, 1), jnp.float32)],       # attention gate
            compiler_params=pltpu.CompilerParams(
                dimension_semantics=("parallel", "arbitrary"),
                vmem_limit_bytes=vmem_limit,
            ),
        )(x, x, wk, bk, wa, ba, wv, bv)

    return _run_with_buffer_fallback(build)


# --------------------------------------------------------------------------- #
# Reference + synthetic init
# --------------------------------------------------------------------------- #
def init_params(key, input_dim, key_dim=64):
    """Deterministic synthetic init (PyTorch Linear-like uniform bounds); weights
    stored as (in, out) so the math is plain x @ W."""
    ks = jax.random.split(key, 6)

    def uniform(k, shape, fan_in):
        bound = 1.0 / jnp.sqrt(fan_in)
        return jax.random.uniform(k, shape, jnp.float32, -bound, bound)

    return {
        "wk": uniform(ks[0], (input_dim, key_dim), input_dim),
        "bk": uniform(ks[1], (1, key_dim), input_dim),
        "wv": uniform(ks[2], (input_dim, input_dim), input_dim),
        "bv": uniform(ks[3], (1, input_dim), input_dim),
        "wa": uniform(ks[4], (key_dim, 1), key_dim),
        "ba": uniform(ks[5], (1, 1), key_dim),
    }


def attention_module_ref(x, p):
    """Pure-JAX reference for correctness checks."""
    keys = jnp.tanh(x @ p["wk"] + p["bk"])
    values = x @ p["wv"] + p["bv"]
    attn = jax.nn.sigmoid(keys @ p["wa"] + p["ba"])
    return x + values * attn


# --------------------------------------------------------------------------- #
# Self-test
# --------------------------------------------------------------------------- #
if __name__ == "__main__":
    key = jax.random.PRNGKey(0)
    kx, kp = jax.random.split(key)

    batch, input_dim, key_dim = 16, 256, 64
    x = jax.random.normal(kx, (batch, input_dim), jnp.float32)
    params = init_params(kp, input_dim, key_dim)
    ref = attention_module_ref(x, params)

    # 1) fp32, resident-Wv path (exact to 1e-5).
    prepared = prepare_params(params)
    out = jax.block_until_ready(attention_module(x, prepared))
    assert out.shape == (batch, input_dim)
    assert jnp.allclose(out, ref, atol=1e-5, rtol=1e-5)

    # 2) Ragged batch + non-128 feature width (masked lane stores, ragged grid tile).
    b2, d2 = 20, 96
    x2 = jax.random.normal(jax.random.fold_in(kx, 1), (b2, d2), jnp.float32)
    params2 = init_params(jax.random.fold_in(kp, 1), d2, key_dim)
    out2 = jax.block_until_ready(attention_module(x2, prepare_params(params2)))
    assert jnp.allclose(out2, attention_module_ref(x2, params2), atol=1e-5, rtol=1e-5)

    # 3) Column-tiled Wv path (large-D / v7x fallback), forced here with a small tile_n.
    out3 = jax.block_until_ready(attention_module(x, prepared, tile_n=128))
    assert jnp.allclose(out3, ref, atol=1e-5, rtol=1e-5)

    # 4) bf16 MXU operands (f32 accumulate + f32 elementwise) -- looser tolerance.
    prepared_bf16 = prepare_params(params, weight_dtype=jnp.bfloat16)
    out4 = jax.block_until_ready(attention_module(x, prepared_bf16))
    assert jnp.allclose(out4, ref, atol=5e-2, rtol=5e-2)

    print("KERNEL_OK")
</pallas_src>

<mosaic_0001>
module attributes {stable_mosaic.version = 11 : i64} {
  func.func @_attention_kernel_resident(%arg0: i32, %arg1: memref<8x256xf32, #tpu.memory_space<vmem>>, %arg2: memref<256x128xf32, #tpu.memory_space<vmem>>, %arg3: memref<1x128xf32, #tpu.memory_space<vmem>>, %arg4: memref<1x128xf32, #tpu.memory_space<vmem>>, %arg5: memref<1xf32, #tpu.memory_space<smem>>, %arg6: memref<256x256xf32, #tpu.memory_space<vmem>>, %arg7: memref<1x256xf32, #tpu.memory_space<vmem>>, %arg8: memref<8x256xf32, #tpu.memory_space<vmem>>) attributes {dimension_semantics = [#tpu.dimension_semantics<parallel>], iteration_bounds = array<i64: 2>, scalar_prefetch = 0 : i64, scratch_operands = 0 : i64, tpu.core_type = #tpu.core_type<tc>, window_params = [{transform_indices = @transform_0, window_bounds = array<i64: 8, 256>}, {pipeline_mode = #tpu.pipeline_mode<synchronous>, transform_indices = @transform_1, window_bounds = array<i64: 256, 128>}, {pipeline_mode = #tpu.pipeline_mode<synchronous>, transform_indices = @transform_2, window_bounds = array<i64: 1, 128>}, {pipeline_mode = #tpu.pipeline_mode<synchronous>, transform_indices = @transform_3, window_bounds = array<i64: 1, 128>}, {transform_indices = @transform_4, window_bounds = array<i64: 1>}, {pipeline_mode = #tpu.pipeline_mode<synchronous>, transform_indices = @transform_5, window_bounds = array<i64: 256, 256>}, {pipeline_mode = #tpu.pipeline_mode<synchronous>, transform_indices = @transform_6, window_bounds = array<i64: 1, 256>}, {transform_indices = @transform_7, window_bounds = array<i64: 8, 256>}]} {
    %c0 = arith.constant 0 : index
    %c0_0 = arith.constant 0 : index
    %0 = vector.load %arg1[%c0, %c0_0] : memref<8x256xf32, #tpu.memory_space<vmem>>, vector<8x256xf32>
    %c0_1 = arith.constant 0 : index
    %c0_2 = arith.constant 0 : index
    %1 = vector.load %arg2[%c0_1, %c0_2] : memref<256x128xf32, #tpu.memory_space<vmem>>, vector<256x128xf32>
    %cst = arith.constant dense<0.000000e+00> : vector<8x128xf32>
    %2 = tpu.matmul %0, %1, %cst {dimension_numbers = #tpu.dot_dimension_numbers<[1], [0], [0], [1], [0, 0, 1, 1], [], []>} : vector<8x256xf32>, vector<256x128xf32>, vector<8x128xf32> -> vector<8x128xf32>
    %c0_3 = arith.constant 0 : index
    %c0_4 = arith.constant 0 : index
    %3 = vector.load %arg3[%c0_3, %c0_4] : memref<1x128xf32, #tpu.memory_space<vmem>>, vector<1x128xf32>
    %4 = vector.broadcast %3 : vector<1x128xf32> to vector<8x128xf32>
    %5 = arith.addf %2, %4 : vector<8x128xf32>
    %6 = math.tanh %5 : vector<8x128xf32>
    %c0_5 = arith.constant 0 : index
    %c0_6 = arith.constant 0 : index
    %7 = vector.load %arg6[%c0_5, %c0_6] : memref<256x256xf32, #tpu.memory_space<vmem>>, vector<256x256xf32>
    %cst_7 = arith.constant dense<0.000000e+00> : vector<8x256xf32>
    %8 = tpu.matmul %0, %7, %cst_7 {dimension_numbers = #tpu.dot_dimension_numbers<[1], [0], [0], [1], [0, 0, 1, 1], [], []>} : vector<8x256xf32>, vector<256x256xf32>, vector<8x256xf32> -> vector<8x256xf32>
    %c0_8 = arith.constant 0 : index
    %c0_9 = arith.constant 0 : index
    %9 = vector.load %arg7[%c0_8, %c0_9] : memref<1x256xf32, #tpu.memory_space<vmem>>, vector<1x256xf32>
    %10 = vector.broadcast %9 : vector<1x256xf32> to vector<8x256xf32>
    %11 = arith.addf %8, %10 : vector<8x256xf32>
    %c0_10 = arith.constant 0 : index
    %c0_11 = arith.constant 0 : index
    %12 = vector.load %arg4[%c0_10, %c0_11] : memref<1x128xf32, #tpu.memory_space<vmem>>, vector<1x128xf32>
    %13 = vector.broadcast %12 : vector<1x128xf32> to vector<8x128xf32>
    %14 = arith.mulf %6, %13 : vector<8x128xf32>
    %cst_12 = arith.constant dense<0.000000e+00> : vector<8xf32>
    %15 = vector.multi_reduction <add>, %14, %cst_12 [1] : vector<8x128xf32> to vector<8xf32>
    %16 = vector.shape_cast %15 : vector<8xf32> to vector<8x1xf32>
    %c0_13 = arith.constant 0 : index
    %17 = memref.load %arg5[%c0_13] : memref<1xf32, #tpu.memory_space<smem>>
    %18 = vector.broadcast %17 : f32 to vector<8x1xf32>
    %19 = arith.addf %16, %18 : vector<8x1xf32>
    %20 = arith.negf %19 : vector<8x1xf32>
    %21 = math.exp %20 : vector<8x1xf32>
    %cst_14 = arith.constant 1.000000e+00 : f32
    %22 = vector.broadcast %cst_14 : f32 to vector<8x1xf32>
    %23 = arith.addf %22, %21 : vector<8x1xf32>
    %24 = arith.divf %22, %23 : vector<8x1xf32>
    %25 = vector.broadcast %24 : vector<8x1xf32> to vector<8x256xf32>
    %26 = arith.mulf %11, %25 : vector<8x256xf32>
    %27 = arith.addf %0, %26 : vector<8x256xf32>
    %c0_15 = arith.constant 0 : index
    %c0_16 = arith.constant 0 : index
    %28 = vector.load %arg8[%c0_15, %c0_16] : memref<8x256xf32, #tpu.memory_space<vmem>>, vector<8x256xf32>
    tpu.vector_store %arg8[%c0_15, %c0_16], %27 {strides = array<i32>} : memref<8x256xf32, #tpu.memory_space<vmem>>, vector<8x256xf32>,
    return
  }
  func.func @transform_0(%arg0: i32) -> (i32, i32) {
    %c0_i32 = arith.constant 0 : i32
    %c0_i32_0 = arith.constant 0 : i32
    return %arg0, %c0_i32 : i32, i32
  }
  func.func @transform_1(%arg0: i32) -> (i32, i32) {
    %c0_i32 = arith.constant 0 : i32
    %c0_i32_0 = arith.constant 0 : i32
    %c0_i32_1 = arith.constant 0 : i32
    return %c0_i32, %c0_i32_0 : i32, i32
  }
  func.func @transform_2(%arg0: i32) -> (i32, i32) {
    %c0_i32 = arith.constant 0 : i32
    %c0_i32_0 = arith.constant 0 : i32
    %c0_i32_1 = arith.constant 0 : i32
    return %c0_i32, %c0_i32_0 : i32, i32
  }
  func.func @transform_3(%arg0: i32) -> (i32, i32) {
    %c0_i32 = arith.constant 0 : i32
    %c0_i32_0 = arith.constant 0 : i32
    %c0_i32_1 = arith.constant 0 : i32
    return %c0_i32, %c0_i32_0 : i32, i32
  }
  func.func @transform_4(%arg0: i32) -> i32 {
    %c0_i32 = arith.constant 0 : i32
    %c0_i32_0 = arith.constant 0 : i32
    return %c0_i32 : i32
  }
  func.func @transform_5(%arg0: i32) -> (i32, i32) {
    %c0_i32 = arith.constant 0 : i32
    %c0_i32_0 = arith.constant 0 : i32
    %c0_i32_1 = arith.constant 0 : i32
    return %c0_i32, %c0_i32_0 : i32, i32
  }
  func.func @transform_6(%arg0: i32) -> (i32, i32) {
    %c0_i32 = arith.constant 0 : i32
    %c0_i32_0 = arith.constant 0 : i32
    %c0_i32_1 = arith.constant 0 : i32
    return %c0_i32, %c0_i32_0 : i32, i32
  }
  func.func @transform_7(%arg0: i32) -> (i32, i32) {
    %c0_i32 = arith.constant 0 : i32
    %c0_i32_0 = arith.constant 0 : i32
    return %arg0, %c0_i32 : i32, i32
  }
}

module attributes {stable_mosaic.version = 11 : i64} {
  func.func @_attention_kernel_resident(%arg0: i32, %arg1: memref<8x256xf32, #tpu.memory_space<vmem>>, %arg2: memref<256x128xf32, #tpu.memory_space<vmem>>, %arg3: memref<1x128xf32, #tpu.memory_space<vmem>>, %arg4: memref<1x128xf32, #tpu.memory_space<vmem>>, %arg5: memref<1xf32, #tpu.memory_space<smem>>, %arg6: memref<256x256xf32, #tpu.memory_space<vmem>>, %arg7: memref<1x256xf32, #tpu.memory_space<vmem>>, %arg8: memref<8x256xf32, #tpu.memory_space<vmem>>) attributes {dimension_semantics = [#tpu.dimension_semantics<parallel>], iteration_bounds = array<i64: 2>, scalar_prefetch = 0 : i64, scratch_operands = 0 : i64, tpu.core_type = #tpu.core_type<tc>, window_params = [{transform_indices = @transform_0, window_bounds = array<i64: 8, 256>}, {pipeline_mode = #tpu.pipeline_mode<synchronous>, transform_indices = @transform_1, window_bounds = array<i64: 256, 128>}, {pipeline_mode = #tpu.pipeline_mode<synchronous>, transform_indices = @transform_2, window_bounds = array<i64: 1, 128>}, {pipeline_mode = #tpu.pipeline_mode<synchronous>, transform_indices = @transform_3, window_bounds = array<i64: 1, 128>}, {transform_indices = @transform_4, window_bounds = array<i64: 1>}, {pipeline_mode = #tpu.pipeline_mode<synchronous>, transform_indices = @transform_5, window_bounds = array<i64: 256, 256>}, {pipeline_mode = #tpu.pipeline_mode<synchronous>, transform_indices = @transform_6, window_bounds = array<i64: 1, 256>}, {transform_indices = @transform_7, window_bounds = array<i64: 8, 256>}]} {
    %c0 = arith.constant 0 : index
    %c0_0 = arith.constant 0 : index
    %0 = vector.load %arg1[%c0, %c0_0] : memref<8x256xf32, #tpu.memory_space<vmem>>, vector<8x256xf32>
    %c0_1 = arith.constant 0 : index
    %c0_2 = arith.constant 0 : index
    %1 = vector.load %arg2[%c0_1, %c0_2] : memref<256x128xf32, #tpu.memory_space<vmem>>, vector<256x128xf32>
    %cst = arith.constant dense<0.000000e+00> : vector<8x128xf32>
    %2 = tpu.matmul %0, %1, %cst {dimension_numbers = #tpu.dot_dimension_numbers<[1], [0], [0], [1], [0, 0, 1, 1], [], []>} : vector<8x256xf32>, vector<256x128xf32>, vector<8x128xf32> -> vector<8x128xf32>
    %c0_3 = arith.constant 0 : index
    %c0_4 = arith.constant 0 : index
    %3 = vector.load %arg3[%c0_3, %c0_4] : memref<1x128xf32, #tpu.memory_space<vmem>>, vector<1x128xf32>
    %4 = vector.broadcast %3 : vector<1x128xf32> to vector<8x128xf32>
    %5 = arith.addf %2, %4 : vector<8x128xf32>
    %6 = math.tanh %5 : vector<8x128xf32>
    %c0_5 = arith.constant 0 : index
    %c0_6 = arith.constant 0 : index
    %7 = vector.load %arg6[%c0_5, %c0_6] : memref<256x256xf32, #tpu.memory_space<vmem>>, vector<256x256xf32>
    %cst_7 = arith.constant dense<0.000000e+00> : vector<8x256xf32>
    %8 = tpu.matmul %0, %7, %cst_7 {dimension_numbers = #tpu.dot_dimension_numbers<[1], [0], [0], [1], [0, 0, 1, 1], [], []>} : vector<8x256xf32>, vector<256x256xf32>, vector<8x256xf32> -> vector<8x256xf32>
    %c0_8 = arith.constant 0 : index
    %c0_9 = arith.constant 0 : index
    %9 = vector.load %arg7[%c0_8, %c0_9] : memref<1x256xf32, #tpu.memory_space<vmem>>, vector<1x256xf32>
    %10 = vector.broadcast %9 : vector<1x256xf32> to vector<8x256xf32>
    %11 = arith.addf %8, %10 : vector<8x256xf32>
    %c0_10 = arith.constant 0 : index
    %c0_11 = arith.constant 0 : index
    %12 = vector.load %arg4[%c0_10, %c0_11] : memref<1x128xf32, #tpu.memory_space<vmem>>, vector<1x128xf32>
    %13 = vector.broadcast %12 : vector<1x128xf32> to vector<8x128xf32>
    %14 = arith.mulf %6, %13 : vector<8x128xf32>
    %cst_12 = arith.constant dense<0.000000e+00> : vector<8xf32>
    %15 = vector.multi_reduction <add>, %14, %cst_12 [1] : vector<8x128xf32> to vector<8xf32>
    %16 = vector.shape_cast %15 : vector<8xf32> to vector<8x1xf32>
    %c0_13 = arith.constant 0 : index
    %17 = memref.load %arg5[%c0_13] : memref<1xf32, #tpu.memory_space<smem>>
    %18 = vector.broadcast %17 : f32 to vector<8x1xf32>
    %19 = arith.addf %16, %18 : vector<8x1xf32>
    %20 = arith.negf %19 : vector<8x1xf32>
    %21 = math.exp %20 : vector<8x1xf32>
    %cst_14 = arith.constant 1.000000e+00 : f32
    %22 = vector.broadcast %cst_14 : f32 to vector<8x1xf32>
    %23 = arith.addf %22, %21 : vector<8x1xf32>
    %24 = arith.divf %22, %23 : vector<8x1xf32>
    %25 = vector.broadcast %24 : vector<8x1xf32> to vector<8x256xf32>
    %26 = arith.mulf %11, %25 : vector<8x256xf32>
    %27 = arith.addf %0, %26 : vector<8x256xf32>
    %c0_15 = arith.constant 0 : index
    %c0_16 = arith.constant 0 : index
    %28 = vector.load %arg8[%c0_15, %c0_16] : memref<8x256xf32, #tpu.memory_space<vmem>>, vector<8x256xf32>
    tpu.vector_store %arg8[%c0_15, %c0_16], %27 {strides = array<i32>} : memref<8x256xf32, #tpu.memory_space<vmem>>, vector<8x256xf32>,
    return
  }
  func.func @transform_0(%arg0: i32) -> (i32, i32) {
    %c0_i32 = arith.constant 0 : i32
    %c0_i32_0 = arith.constant 0 : i32
    return %arg0, %c0_i32 : i32, i32
  }
  func.func @transform_1(%arg0: i32) -> (i32, i32) {
    %c0_i32 = arith.constant 0 : i32
    %c0_i32_0 = arith.constant 0 : i32
    %c0_i32_1 = arith.constant 0 : i32
    return %c0_i32, %c0_i32_0 : i32, i32
  }
  func.func @transform_2(%arg0: i32) -> (i32, i32) {
    %c0_i32 = arith.constant 0 : i32
    %c0_i32_0 = arith.constant 0 : i32
    %c0_i32_1 = arith.constant 0 : i32
    return %c0_i32, %c0_i32_0 : i32, i32
  }
  func.func @transform_3(%arg0: i32) -> (i32, i32) {
    %c0_i32 = arith.constant 0 : i32
    %c0_i32_0 = arith.constant 0 : i32
    %c0_i32_1 = arith.constant 0 : i32
    return %c0_i32, %c0_i32_0 : i32, i32
  }
  func.func @transform_4(%arg0: i32) -> i32 {
    %c0_i32 = arith.constant 0 : i32
    %c0_i32_0 = arith.constant 0 : i32
    return %c0_i32 : i32
  }
  func.func @transform_5(%arg0: i32) -> (i32, i32) {
    %c0_i32 = arith.constant 0 : i32
    %c0_i32_0 = arith.constant 0 : i32
    %c0_i32_1 = arith.constant 0 : i32
    return %c0_i32, %c0_i32_0 : i32, i32
  }
  func.func @transform_6(%arg0: i32) -> (i32, i32) {
    %c0_i32 = arith.constant 0 : i32
    %c0_i32_0 = arith.constant 0 : i32
    %c0_i32_1 = arith.constant 0 : i32
    return %c0_i32, %c0_i32_0 : i32, i32
  }
  func.func @transform_7(%arg0: i32) -> (i32, i32) {
    %c0_i32 = arith.constant 0 : i32
    %c0_i32_0 = arith.constant 0 : i32
    return %arg0, %c0_i32 : i32, i32
  }
}

</mosaic_0001>

<llo_original>
// kernel: tpu_custom_call.1
$region0: #{tpu_custom_call.1}
  #allocation0 [shape = 'u32[]', space=smem, size = 0x4, offset = 0x4, fixed_abs, tag = 'smem constant byte address 0x4 - core index']
  #allocation1 [shape = 'u32[144,128]{1,0:T(1,128)}', space=vmem, size = 0x12000, scoped, tag = 'internal scratch']
  #allocation2 [shape = 'f32[1]{0:T(128)S(6)}', space=smem, size = 0x200, scoped, tag = 'scoped memory for tpu_custom_call.1']
  %s0 = inlined_call_operand.hbm [shape: f32[16,256], index: 0, kind: input, shape index: {}]
  %s1 = inlined_call_operand.hbm [shape: f32[256,128], index: 1, kind: input, shape index: {}]
  %s2 = inlined_call_operand.vmem [shape: f32[1,128], index: 2, kind: input, shape index: {}]
  %s3 = inlined_call_operand.vmem [shape: f32[1,128], index: 3, kind: input, shape index: {}]
  %s4 = inlined_call_operand.<no memory space> [shape: f32[1], index: 4, kind: input, shape index: {}]
  %s5 = inlined_call_operand.hbm [shape: f32[256,256], index: 5, kind: input, shape index: {}]
  %s6 = inlined_call_operand.vmem [shape: f32[1,256], index: 6, kind: input, shape index: {}]
  %s7 = inlined_call_operand.hbm [shape: f32[16,256], index: 7, kind: output, shape index: {}]
  %s8 = sld [smem:[#allocation0]]
  $region73: #{tpu_custom_call.1} parent=0
    _
  %s10 = ssub.s32 1, %s8
  %s11 = scalar_select 0, %s10, %s8
  %12 = sst [smem:[#allocation2]] %s4
  $region1: #{tpu_custom_call.1} parent=0
    #allocation3 [shape = 'u8[16384]{0}', space=vmem, size = 0x4000, scoped, tag = 'input window, operand 0']
    #allocation4 [shape = 's32[2]{0}', space=sflag, size = 0x8, scoped, tag = 'scoped memory for tpu_custom_call.1']
    #allocation5 [shape = 's32[2]{0}', space=sflag, size = 0x8, scoped, tag = 'scoped memory for tpu_custom_call.1']
    #allocation6 [shape = 'u8[131072]{0}', space=vmem, size = 0x20000, scoped, tag = 'input window, operand 1, single buffered']
    #allocation7 [shape = 's32[1]{0}', space=sflag, size = 0x4, scoped, tag = 'scoped memory for tpu_custom_call.1']
    #allocation8 [shape = 'u8[262144]{0}', space=vmem, size = 0x40000, scoped, tag = 'input window, operand 5, single buffered']
    #allocation9 [shape = 'u8[16384]{0}', space=vmem, size = 0x4000, scoped, tag = 'output window, operand 0']
    %13 = vsyncpa [#allocation4], 0
    %s14 = scalar_lea.sflag [#allocation4], 1
    %15 = vsyncpa %s14, 0
    %16 = vsyncpa [#allocation7], 0
    %17 = vsyncpa [#allocation5], 0
    %s18 = scalar_lea.sflag [#allocation5], 1
    %19 = vsyncpa %s18, 0
    loop: start=0, step=1, limit=4
    $region2: #{tpu_custom_call.1} parent=1 // loop_pre_header
      _
    $region3: #{tpu_custom_call.1} parent=1 // loop_header
      %s21 = sphi 0, %s25
      %p22 = scmp.ge.s32.totalorder %s21, 4
      %s31 = sphi 0, %s33
      %s34 = sphi 0, %s31
      %s35 = sphi 0, %s34
      %s51 = sphi 0, %s35
      %s55 = sphi 0, %s55
      %s57 = sphi 0, %s55
      %s58 = sphi 0, %s57
      %s72 = sphi 0, %s58
      %s76 = sphi 0, %s76
      %s78 = sphi 0, %s76
      %s79 = sphi 0, %s78
      %s93 = sphi 0, %s79
      %s97 = sphi 0, %s97
      %s99 = sphi 0, %s97
      %s100 = sphi 0, %s99
      %s114 = sphi 0, %s100
      %s118 = sphi 0, %s118
      %s120 = sphi 0, %s118
      %s121 = sphi 0, %s120
      %s135 = sphi 0, %s121
      %s139 = sphi 0, %s139
      %s141 = sphi 0, %s139
      %s142 = sphi 0, %s141
      %s156 = sphi 0, %s142
      %s160 = sphi 0, %s160
      %s162 = sphi 0, %s160
      %s163 = sphi 0, %s162
      %s177 = sphi 0, %s163
      %s183 = sphi 0, %s185
      %s186 = sphi 0, %s183
      %s187 = sphi 0, %s186
      %s203 = sphi 0, %s187
    $region4: #{tpu_custom_call.1} parent=1 // loop_header_branch
      %24 = sbr.rel (%p22) target = $region8
    $region5: #{tpu_custom_call.1} parent=1 // loop_body
      %s26 = ssub.s32 %s21, 1
      %s27 = ssub.s32 %s21, 2
      %s28 = sadd.s32 %s21, 1
      %s29 = ssub.s32 %s21, %s28
      %p30 = scmp.eq.s32.totalorder %s29, 0
      %s32 = sadd.s32 %s31, 1
      %s33 = scalar_select %p30, %s31, %s32
      %p36 = pneg %p30
      %p37 = scmp.eq.s32.totalorder %s21, 1
      %p38 = por %p36, %p37
      %p39 = scmp.ne.s32.totalorder %s31, %s34
      %p40 = scmp.eq.s32.totalorder %s21, 0
      %p41 = por %p39, %p40
      %p42 = scmp.ne.s32.totalorder %s31, %s34
      %p43 = scmp.eq.s32.totalorder %s26, 1
      %p44 = por %p42, %p43
      %p45 = scmp.ne.s32.totalorder %s34, %s35
      %p46 = scmp.eq.s32.totalorder %s26, 0
      %p47 = por %p45, %p46
      %p48 = scmp.ne.s32.totalorder %s34, %s35
      %p49 = scmp.eq.s32.totalorder %s27, 1
      %p50 = por %p48, %p49
      %p52 = scmp.ne.s32.totalorder %s35, %s51
      %p53 = scmp.eq.s32.totalorder %s27, 0
      %p54 = por %p52, %p53
      %s56 = sadd.s32 %s55, 1
      %p59 = scmp.eq.s32.totalorder %s21, 1
      %p60 = scmp.ne.s32.totalorder %s55, %s57
      %p61 = scmp.eq.s32.totalorder %s21, 0
      %p62 = por %p60, %p61
      %p63 = scmp.ne.s32.totalorder %s55, %s57
      %p64 = scmp.eq.s32.totalorder %s26, 1
      %p65 = por %p63, %p64
      %p66 = scmp.ne.s32.totalorder %s57, %s58
      %p67 = scmp.eq.s32.totalorder %s26, 0
      %p68 = por %p66, %p67
      %p69 = scmp.ne.s32.totalorder %s57, %s58
      %p70 = scmp.eq.s32.totalorder %s27, 1
      %p71 = por %p69, %p70
      %p73 = scmp.ne.s32.totalorder %s58, %s72
      %p74 = scmp.eq.s32.totalorder %s27, 0
      %p75 = por %p73, %p74
      %s77 = sadd.s32 %s76, 1
      %p80 = scmp.eq.s32.totalorder %s21, 1
      %p81 = scmp.ne.s32.totalorder %s76, %s78
      %p82 = scmp.eq.s32.totalorder %s21, 0
      %p83 = por %p81, %p82
      %p84 = scmp.ne.s32.totalorder %s76, %s78
      %p85 = scmp.eq.s32.totalorder %s26, 1
      %p86 = por %p84, %p85
      %p87 = scmp.ne.s32.totalorder %s78, %s79
      %p88 = scmp.eq.s32.totalorder %s26, 0
      %p89 = por %p87, %p88
      %p90 = scmp.ne.s32.totalorder %s78, %s79
      %p91 = scmp.eq.s32.totalorder %s27, 1
      %p92 = por %p90, %p91
      %p94 = scmp.ne.s32.totalorder %s79, %s93
      %p95 = scmp.eq.s32.totalorder %s27, 0
      %p96 = por %p94, %p95
      %s98 = sadd.s32 %s97, 1
      %p101 = scmp.eq.s32.totalorder %s21, 1
      %p102 = scmp.ne.s32.totalorder %s97, %s99
      %p103 = scmp.eq.s32.totalorder %s21, 0
      %p104 = por %p102, %p103
      %p105 = scmp.ne.s32.totalorder %s97, %s99
      %p106 = scmp.eq.s32.totalorder %s26, 1
      %p107 = por %p105, %p106
      %p108 = scmp.ne.s32.totalorder %s99, %s100
      %p109 = scmp.eq.s32.totalorder %s26, 0
      %p110 = por %p108, %p109
      %p111 = scmp.ne.s32.totalorder %s99, %s100
      %p112 = scmp.eq.s32.totalorder %s27, 1
      %p113 = por %p111, %p112
      %p115 = scmp.ne.s32.totalorder %s100, %s114
      %p116 = scmp.eq.s32.totalorder %s27, 0
      %p117 = por %p115, %p116
      %s119 = sadd.s32 %s118, 1
      %p122 = scmp.eq.s32.totalorder %s21, 1
      %p123 = scmp.ne.s32.totalorder %s118, %s120
      %p124 = scmp.eq.s32.totalorder %s21, 0
      %p125 = por %p123, %p124
      %p126 = scmp.ne.s32.totalorder %s118, %s120
      %p127 = scmp.eq.s32.totalorder %s26, 1
      %p128 = por %p126, %p127
      %p129 = scmp.ne.s32.totalorder %s120, %s121
      %p130 = scmp.eq.s32.totalorder %s26, 0
      %p131 = por %p129, %p130
      %p132 = scmp.ne.s32.totalorder %s120, %s121
      %p133 = scmp.eq.s32.totalorder %s27, 1
      %p134 = por %p132, %p133
      %p136 = scmp.ne.s32.totalorder %s121, %s135
      %p137 = scmp.eq.s32.totalorder %s27, 0
      %p138 = por %p136, %p137
      %s140 = sadd.s32 %s139, 1
      %p143 = scmp.eq.s32.totalorder %s21, 1
      %p144 = scmp.ne.s32.totalorder %s139, %s141
      %p145 = scmp.eq.s32.totalorder %s21, 0
      %p146 = por %p144, %p145
      %p147 = scmp.ne.s32.totalorder %s139, %s141
      %p148 = scmp.eq.s32.totalorder %s26, 1
      %p149 = por %p147, %p148
      %p150 = scmp.ne.s32.totalorder %s141, %s142
      %p151 = scmp.eq.s32.totalorder %s26, 0
      %p152 = por %p150, %p151
      %p153 = scmp.ne.s32.totalorder %s141, %s142
      %p154 = scmp.eq.s32.totalorder %s27, 1
      %p155 = por %p153, %p154
      %p157 = scmp.ne.s32.totalorder %s142, %s156
      %p158 = scmp.eq.s32.totalorder %s27, 0
      %p159 = por %p157, %p158
      %s161 = sadd.s32 %s160, 1
      %p164 = scmp.eq.s32.totalorder %s21, 1
      %p165 = scmp.ne.s32.totalorder %s160, %s162
      %p166 = scmp.eq.s32.totalorder %s21, 0
      %p167 = por %p165, %p166
      %p168 = scmp.ne.s32.totalorder %s160, %s162
      %p169 = scmp.eq.s32.totalorder %s26, 1
      %p170 = por %p168, %p169
      %p171 = scmp.ne.s32.totalorder %s162, %s163
      %p172 = scmp.eq.s32.totalorder %s26, 0
      %p173 = por %p171, %p172
      %p174 = scmp.ne.s32.totalorder %s162, %s163
      %p175 = scmp.eq.s32.totalorder %s27, 1
      %p176 = por %p174, %p175
      %p178 = scmp.ne.s32.totalorder %s163, %s177
      %p179 = scmp.eq.s32.totalorder %s27, 0
      %p180 = por %p178, %p179
      %s181 = ssub.s32 %s21, %s28
      %p182 = scmp.eq.s32.totalorder %s181, 0
      %s184 = sadd.s32 %s183, 1
      %s185 = scalar_select %p182, %s183, %s184
      %p188 = pneg %p182
      %p189 = scmp.eq.s32.totalorder %s21, 1
      %p190 = por %p188, %p189
      %p191 = scmp.ne.s32.totalorder %s183, %s186
      %p192 = scmp.eq.s32.totalorder %s21, 0
      %p193 = por %p191, %p192
      %p194 = scmp.ne.s32.totalorder %s183, %s186
      %p195 = scmp.eq.s32.totalorder %s26, 1
      %p196 = por %p194, %p195
      %p197 = scmp.ne.s32.totalorder %s186, %s187
      %p198 = scmp.eq.s32.totalorder %s26, 0
      %p199 = por %p197, %p198
      %p200 = scmp.ne.s32.totalorder %s186, %s187
      %p201 = scmp.eq.s32.totalorder %s27, 1
      %p202 = por %p200, %p201
      %p204 = scmp.ne.s32.totalorder %s187, %s203
      %p205 = scmp.eq.s32.totalorder %s27, 0
      %p206 = por %p204, %p205
      %p207 = scmp.le.s32.totalorder 1, %s21
      %p208 = scmp.lt.s32.totalorder %s21, 3
      %p209 = pnand %p207, %p208
      %p210 = pneg %p209
      // Predicated region
      $region9: #{tpu_custom_call.1} parent=5 // pred_check
        _
      $region10: #{tpu_custom_call.1} parent=5 // pred_check_branch
        %212 = sbr.rel (%p209) target = $region12
      $region11: #{tpu_custom_call.1} parent=5 // pred_region
        %s213 = ssub.s32 %s21, 1
        // Predicated region
        $region13: #{tpu_custom_call.1} parent=11 // pred_check
          %p214 = pneg %p68
        $region14: #{tpu_custom_call.1} parent=11 // pred_check_branch
          %216 = sbr.rel (%p214) target = $region16
        $region15: #{tpu_custom_call.1} parent=11 // pred_region
          %s218 = ssub.s32 4096, 4096
          %219 = vsyncadd [#allocation7], %s218
          %s220 = sshll.u32 [#allocation6], 4
          %s221 = int_to_ptr.vmem [resolvable:$true] %s220
          %226 = dma.hbm_to_vmem [thread:$0]  %s1, 4096, %s221, [#allocation7], 128, 128, 8
        $region16: #{tpu_custom_call.1} parent=11 // pred_fallthru
          _
        // Predicated region
        $region17: #{tpu_custom_call.1} parent=11 // pred_check
          %p227 = pneg %p89
        $region18: #{tpu_custom_call.1} parent=11 // pred_check_branch
          %229 = sbr.rel (%p227) target = $region20
        $region19: #{tpu_custom_call.1} parent=11 // pred_region
          _
        $region20: #{tpu_custom_call.1} parent=11 // pred_fallthru
          _
        // Predicated region
        $region21: #{tpu_custom_call.1} parent=11 // pred_check
          %p230 = pneg %p110
        $region22: #{tpu_custom_call.1} parent=11 // pred_check_branch
          %232 = sbr.rel (%p230) target = $region24
        $region23: #{tpu_custom_call.1} parent=11 // pred_region
          _
        $region24: #{tpu_custom_call.1} parent=11 // pred_fallthru
          _
        // Predicated region
        $region25: #{tpu_custom_call.1} parent=11 // pred_check
          %p233 = pneg %p131
        $region26: #{tpu_custom_call.1} parent=11 // pred_check_branch
          %235 = sbr.rel (%p233) target = $region28
        $region27: #{tpu_custom_call.1} parent=11 // pred_region
          _
        $region28: #{tpu_custom_call.1} parent=11 // pred_fallthru
          _
        // Predicated region
        $region29: #{tpu_custom_call.1} parent=11 // pred_check
          %p236 = pneg %p152
        $region30: #{tpu_custom_call.1} parent=11 // pred_check_branch
          %238 = sbr.rel (%p236) target = $region32
        $region31: #{tpu_custom_call.1} parent=11 // pred_region
          %s240 = ssub.s32 8192, 8192
          %241 = vsyncadd [#allocation7], %s240
          %s242 = sshll.u32 [#allocation8], 4
          %s243 = int_to_ptr.vmem [resolvable:$true] %s242
          %248 = dma.hbm_to_vmem [thread:$0]  %s5, 8192, %s243, [#allocation7], 256, 256, 16
        $region32: #{tpu_custom_call.1} parent=11 // pred_fallthru
          _
        // Predicated region
        $region33: #{tpu_custom_call.1} parent=11 // pred_check
          %p249 = pneg %p173
        $region34: #{tpu_custom_call.1} parent=11 // pred_check_branch
          %251 = sbr.rel (%p249) target = $region36
        $region35: #{tpu_custom_call.1} parent=11 // pred_region
          _
        $region36: #{tpu_custom_call.1} parent=11 // pred_fallthru
          _
      $region12: #{tpu_custom_call.1} parent=5 // pred_fallthru
        _
      %p252 = scmp.lt.s32.totalorder %s21, 2
      // Predicated region
      $region37: #{tpu_custom_call.1} parent=5 // pred_check
        %p253 = pneg %p252
      $region38: #{tpu_custom_call.1} parent=5 // pred_check_branch
        %255 = sbr.rel (%p253) target = $region40
      $region39: #{tpu_custom_call.1} parent=5 // pred_region
        // Predicated region
        $region41: #{tpu_custom_call.1} parent=39 // pred_check
          %p256 = pneg %p41
        $region42: #{tpu_custom_call.1} parent=39 // pred_check_branch
          %258 = sbr.rel (%p256) target = $region44
        $region43: #{tpu_custom_call.1} parent=39 // pred_region
          %s259 = sand.u32 %s31, 1
          %s260 = scalar_lea.sflag [#allocation4], %s259
          %s261 = sand.u32 %s31, 1
          %s262 = smul.addr %s261, 16
          %s263 = scalar_lea.vmem [#allocation3], %s262
          %s265 = ssub.s32 256, 256
          %266 = vsyncadd %s260, %s265
          %s267 = smul.addr %s21, 2
          %s268 = smul.addr %s267, 128
          %s269 = scalar_lea.hbm %s0, %s268
          %s271 = sshll.u32 %s263, 4
          %s272 = int_to_ptr.vmem [resolvable:$true] %s271
          %274 = dma.hbm_to_vmem [thread:$0]  %s269, 256, %s272, %s260
        $region44: #{tpu_custom_call.1} parent=39 // pred_fallthru
          _
      $region40: #{tpu_custom_call.1} parent=5 // pred_fallthru
        _
      %p275 = scmp.le.s32.totalorder 1, %s21
      %p276 = scmp.lt.s32.totalorder %s21, 3
      %p277 = pnand %p275, %p276
      %p278 = pneg %p277
      // Predicated region
      $region45: #{tpu_custom_call.1} parent=5 // pred_check
        _
      $region46: #{tpu_custom_call.1} parent=5 // pred_check_branch
        %280 = sbr.rel (%p277) target = $region48
      $region47: #{tpu_custom_call.1} parent=5 // pred_region
        %s281 = ssub.s32 %s21, 1
        %s282 = sand.u32 %s34, 1
        %s283 = scalar_lea.sflag [#allocation4], %s282
        %s284 = sand.u32 %s34, 1
        %s285 = smul.addr %s284, 16
        %s286 = scalar_lea.vmem [#allocation3], %s285
        // Predicated region
        $region49: #{tpu_custom_call.1} parent=47 // pred_check
          %p287 = pneg %p47
        $region50: #{tpu_custom_call.1} parent=47 // pred_check_branch
          %289 = sbr.rel (%p287) target = $region52
        $region51: #{tpu_custom_call.1} parent=47 // pred_region
          %290 = dma.done %s283, 256
        $region52: #{tpu_custom_call.1} parent=47 // pred_fallthru
          _
        // Predicated region
        $region53: #{tpu_custom_call.1} parent=47 // pred_check
          %p291 = pneg %p68
        $region54: #{tpu_custom_call.1} parent=47 // pred_check_branch
          %293 = sbr.rel (%p291) target = $region56
        $region55: #{tpu_custom_call.1} parent=47 // pred_region
          %294 = dma.done [#allocation7], 4096
        $region56: #{tpu_custom_call.1} parent=47 // pred_fallthru
          _
        // Predicated region
        $region57: #{tpu_custom_call.1} parent=47 // pred_check
          %p295 = pneg %p152
        $region58: #{tpu_custom_call.1} parent=47 // pred_check_branch
          %297 = sbr.rel (%p295) target = $region60
        $region59: #{tpu_custom_call.1} parent=47 // pred_region
          %298 = dma.done [#allocation7], 8192
        $region60: #{tpu_custom_call.1} parent=47 // pred_fallthru
          _
        %s299 = sand.u32 %s34, 1
        %s300 = scalar_lea.sflag [#allocation4], %s299
        %s301 = sand.u32 %s34, 1
        %s302 = smul.addr %s301, 16
        %s303 = scalar_lea.vmem [#allocation3], %s302
        %p304 = pneg %p47
        %p305 = pneg %p44
        %p306 = pneg %p68
        %p307 = pneg %p65
        %p308 = pneg %p89
        %p309 = pneg %p86
        %p310 = pneg %p110
        %p311 = pneg %p107
        %p312 = pneg %p131
        %p313 = pneg %p128
        %p314 = pneg %p152
        %p315 = pneg %p149
        %p316 = pneg %p173
        %p317 = pneg %p170
        %p318 = pneg %p199
        %p319 = pneg %p196
        %s320 = sand.u32 %s186, 1
        %s321 = scalar_lea.sflag [#allocation5], %s320
        %s322 = sand.u32 %s186, 1
        %s323 = smul.addr %s322, 16
        %s324 = scalar_lea.vmem [#allocation9], %s323
        %v325 = vld [vmem:[%s286] sm:$0xff]
        %v326 = vld [vmem:[%s286 + $0x8] sm:$0xff]
        %v327 = vld [vmem:[#allocation6] sm:$0xff]
        %v328 = vld [vmem:[#allocation6 + $0x8] sm:$0xff]
        %v329 = vld [vmem:[#allocation6 + $0x10] sm:$0xff]
        %v330 = vld [vmem:[#allocation6 + $0x18] sm:$0xff]
        %v331 = vld [vmem:[#allocation6 + $0x20] sm:$0xff]
        %v332 = vld [vmem:[#allocation6 + $0x28] sm:$0xff]
        %v333 = vld [vmem:[#allocation6 + $0x30] sm:$0xff]
        %v334 = vld [vmem:[#allocation6 + $0x38] sm:$0xff]
        %v335 = vld [vmem:[#allocation6 + $0x40] sm:$0xff]
        %v336 = vld [vmem:[#allocation6 + $0x48] sm:$0xff]
        %v337 = vld [vmem:[#allocation6 + $0x50] sm:$0xff]
        %v338 = vld [vmem:[#allocation6 + $0x58] sm:$0xff]
        %v339 = vld [vmem:[#allocation6 + $0x60] sm:$0xff]
        %v340 = vld [vmem:[#allocation6 + $0x68] sm:$0xff]
        %v341 = vld [vmem:[#allocation6 + $0x70] sm:$0xff]
        %v342 = vld [vmem:[#allocation6 + $0x78] sm:$0xff]
        %v343 = vld [vmem:[#allocation6 + $0x80] sm:$0xff]
        %v344 = vld [vmem:[#allocation6 + $0x88] sm:$0xff]
        %v345 = vld [vmem:[#allocation6 + $0x90] sm:$0xff]
        %v346 = vld [vmem:[#allocation6 + $0x98] sm:$0xff]
        %v347 = vld [vmem:[#allocation6 + $0xa0] sm:$0xff]
        %v348 = vld [vmem:[#allocation6 + $0xa8] sm:$0xff]
        %v349 = vld [vmem:[#allocation6 + $0xb0] sm:$0xff]
        %v350 = vld [vmem:[#allocation6 + $0xb8] sm:$0xff]
        %v351 = vld [vmem:[#allocation6 + $0xc0] sm:$0xff]
        %v352 = vld [vmem:[#allocation6 + $0xc8] sm:$0xff]
        %v353 = vld [vmem:[#allocation6 + $0xd0] sm:$0xff]
        %v354 = vld [vmem:[#allocation6 + $0xd8] sm:$0xff]
        %v355 = vld [vmem:[#allocation6 + $0xe0] sm:$0xff]
        %v356 = vld [vmem:[#allocation6 + $0xe8] sm:$0xff]
        %v357 = vld [vmem:[#allocation6 + $0xf0] sm:$0xff]
        %v358 = vld [vmem:[#allocation6 + $0xf8] sm:$0xff]
        %v359 = vld [vmem:[%s2] sm:$0x1]
        %v361 = vlaneseq
        %v362 = vshrl.u32 %v361, 7
        %v363 = vsub.s32 0, %v362
        %v364 = vrot.slane %v359, %v363
        %366 = vmatprep.subr.mxu0 0.0
        %367 = vmatpush1.msra.mxu0 %v342
        %368 = vmatprep.subr.mxu0 0.0
        %369 = vmatpush1.msra.mxu0 %v341
        %370 = vmatprep.subr.mxu0 0.0
        %371 = vmatpush1.msra.mxu0 %v340
        %372 = vmatprep.subr.mxu0 0.0
        %373 = vmatpush1.msra.mxu0 %v339
        %374 = vmatprep.subr.mxu0 0.0
        %375 = vmatpush1.msra.mxu0 %v338
        %376 = vmatprep.subr.mxu0 0.0
        %377 = vmatpush1.msra.mxu0 %v337
        %378 = vmatprep.subr.mxu0 0.0
        %379 = vmatpush1.msra.mxu0 %v336
        %380 = vmatprep.subr.mxu0 0.0
        %381 = vmatpush1.msra.mxu0 %v335
        %382 = vmatprep.subr.mxu0 0.0
        %383 = vmatpush1.msra.mxu0 %v334
        %384 = vmatprep.subr.mxu0 0.0
        %385 = vmatpush1.msra.mxu0 %v333
        %386 = vmatprep.subr.mxu0 0.0
        %387 = vmatpush1.msra.mxu0 %v332
        %388 = vmatprep.subr.mxu0 0.0
        %389 = vmatpush1.msra.mxu0 %v331
        %390 = vmatprep.subr.mxu0 0.0
        %391 = vmatpush1.msra.mxu0 %v330
        %392 = vmatprep.subr.mxu0 0.0
        %393 = vmatpush1.msra.mxu0 %v329
        %394 = vmatprep.subr.mxu0 0.0
        %395 = vmatpush1.msra.mxu0 %v328
        %396 = vmatprep.subr.mxu0 0.0
        %397 = vmatpush1.msra.mxu0 %v327
        %398 = vmatprep.subr.mxu0 0.0
        %399 = vmatpush2.msra.mxu0 %v358
        %400 = vmatprep.subr.mxu0 0.0
        %401 = vmatpush2.msra.mxu0 %v357
        %402 = vmatprep.subr.mxu0 0.0
        %403 = vmatpush2.msra.mxu0 %v356
        %404 = vmatprep.subr.mxu0 0.0
        %405 = vmatpush2.msra.mxu0 %v355
        %406 = vmatprep.subr.mxu0 0.0
        %407 = vmatpush2.msra.mxu0 %v354
        %408 = vmatprep.subr.mxu0 0.0
        %409 = vmatpush2.msra.mxu0 %v353
        %410 = vmatprep.subr.mxu0 0.0
        %411 = vmatpush2.msra.mxu0 %v352
        %412 = vmatprep.subr.mxu0 0.0
        %413 = vmatpush2.msra.mxu0 %v351
        %414 = vmatprep.subr.mxu0 0.0
        %415 = vmatpush2.msra.mxu0 %v350
        %416 = vmatprep.subr.mxu0 0.0
        %417 = vmatpush2.msra.mxu0 %v349
        %418 = vmatprep.subr.mxu0 0.0
        %419 = vmatpush2.msra.mxu0 %v348
        %420 = vmatprep.subr.mxu0 0.0
        %421 = vmatpush2.msra.mxu0 %v347
        %422 = vmatprep.subr.mxu0 0.0
        %423 = vmatpush2.msra.mxu0 %v346
        %424 = vmatprep.subr.mxu0 0.0
        %425 = vmatpush2.msra.mxu0 %v345
        %426 = vmatprep.subr.mxu0 0.0
        %427 = vmatpush2.msra.mxu0 %v344
        %428 = vmatprep.subr.mxu0 0.0
        %429 = vmatpush2.msra.mxu0 %v343
        %430 = vmatprep.mubr.f32.mxu0 %v326
        %431 = vmatmul.mubr.f32.gmra.mxu0 %v325
        %v432 = vpop.f32.mrf.mxu0
        %v433 = vadd.f32 %v364, %v432
        %v434 = vpop.f32.mrf.mxu0
        %435 = vdwg.mxu0
        %v436 = vtanh.pop %v433
        %v437 = vld [vmem:[#allocation8] sm:$0xff]
        %v438 = vld [vmem:[#allocation8 + $0x8] sm:$0xff]
        %v439 = vld [vmem:[#allocation8 + $0x10] sm:$0xff]
        %v440 = vld [vmem:[#allocation8 + $0x18] sm:$0xff]
        %v441 = vld [vmem:[#allocation8 + $0x20] sm:$0xff]
        %v442 = vld [vmem:[#allocation8 + $0x28] sm:$0xff]
        %v443 = vld [vmem:[#allocation8 + $0x30] sm:$0xff]
        %v444 = vld [vmem:[#allocation8 + $0x38] sm:$0xff]
        %v445 = vld [vmem:[#allocation8 + $0x40] sm:$0xff]
        %v446 = vld [vmem:[#allocation8 + $0x48] sm:$0xff]
        %v447 = vld [vmem:[#allocation8 + $0x50] sm:$0xff]
        %v448 = vld [vmem:[#allocation8 + $0x58] sm:$0xff]
        %v449 = vld [vmem:[#allocation8 + $0x60] sm:$0xff]
        %v450 = vld [vmem:[#allocation8 + $0x68] sm:$0xff]
        %v451 = vld [vmem:[#allocation8 + $0x70] sm:$0xff]
        %v452 = vld [vmem:[#allocation8 + $0x78] sm:$0xff]
        %v453 = vld [vmem:[#allocation8 + $0x80] sm:$0xff]
        %v454 = vld [vmem:[#allocation8 + $0x88] sm:$0xff]
        %v455 = vld [vmem:[#allocation8 + $0x90] sm:$0xff]
        %v456 = vld [vmem:[#allocation8 + $0x98] sm:$0xff]
        %v457 = vld [vmem:[#allocation8 + $0xa0] sm:$0xff]
        %v458 = vld [vmem:[#allocation8 + $0xa8] sm:$0xff]
        %v459 = vld [vmem:[#allocation8 + $0xb0] sm:$0xff]
        %v460 = vld [vmem:[#allocation8 + $0xb8] sm:$0xff]
        %v461 = vld [vmem:[#allocation8 + $0xc0] sm:$0xff]
        %v462 = vld [vmem:[#allocation8 + $0xc8] sm:$0xff]
        %v463 = vld [vmem:[#allocation8 + $0xd0] sm:$0xff]
        %v464 = vld [vmem:[#allocation8 + $0xd8] sm:$0xff]
        %v465 = vld [vmem:[#allocation8 + $0xe0] sm:$0xff]
        %v466 = vld [vmem:[#allocation8 + $0xe8] sm:$0xff]
        %v467 = vld [vmem:[#allocation8 + $0xf0] sm:$0xff]
        %v468 = vld [vmem:[#allocation8 + $0xf8] sm:$0xff]
        %v469 = vld [vmem:[#allocation8 + $0x100] sm:$0xff]
        %v470 = vld [vmem:[#allocation8 + $0x108] sm:$0xff]
        %v471 = vld [vmem:[#allocation8 + $0x110] sm:$0xff]
        %v472 = vld [vmem:[#allocation8 + $0x118] sm:$0xff]
        %v473 = vld [vmem:[#allocation8 + $0x120] sm:$0xff]
        %v474 = vld [vmem:[#allocation8 + $0x128] sm:$0xff]
        %v475 = vld [vmem:[#allocation8 + $0x130] sm:$0xff]
        %v476 = vld [vmem:[#allocation8 + $0x138] sm:$0xff]
        %v477 = vld [vmem:[#allocation8 + $0x140] sm:$0xff]
        %v478 = vld [vmem:[#allocation8 + $0x148] sm:$0xff]
        %v479 = vld [vmem:[#allocation8 + $0x150] sm:$0xff]
        %v480 = vld [vmem:[#allocation8 + $0x158] sm:$0xff]
        %v481 = vld [vmem:[#allocation8 + $0x160] sm:$0xff]
        %v482 = vld [vmem:[#allocation8 + $0x168] sm:$0xff]
        %v483 = vld [vmem:[#allocation8 + $0x170] sm:$0xff]
        %v484 = vld [vmem:[#allocation8 + $0x178] sm:$0xff]
        %v485 = vld [vmem:[#allocation8 + $0x180] sm:$0xff]
        %v486 = vld [vmem:[#allocation8 + $0x188] sm:$0xff]
        %v487 = vld [vmem:[#allocation8 + $0x190] sm:$0xff]
        %v488 = vld [vmem:[#allocation8 + $0x198] sm:$0xff]
        %v489 = vld [vmem:[#allocation8 + $0x1a0] sm:$0xff]
        %v490 = vld [vmem:[#allocation8 + $0x1a8] sm:$0xff]
        %v491 = vld [vmem:[#allocation8 + $0x1b0] sm:$0xff]
        %v492 = vld [vmem:[#allocation8 + $0x1b8] sm:$0xff]
        %v493 = vld [vmem:[#allocation8 + $0x1c0] sm:$0xff]
        %v494 = vld [vmem:[#allocation8 + $0x1c8] sm:$0xff]
        %v495 = vld [vmem:[#allocation8 + $0x1d0] sm:$0xff]
        %v496 = vld [vmem:[#allocation8 + $0x1d8] sm:$0xff]
        %v497 = vld [vmem:[#allocation8 + $0x1e0] sm:$0xff]
        %v498 = vld [vmem:[#allocation8 + $0x1e8] sm:$0xff]
        %v499 = vld [vmem:[#allocation8 + $0x1f0] sm:$0xff]
        %v500 = vld [vmem:[#allocation8 + $0x1f8] sm:$0xff]
        %v501 = vld [vmem:[%s6] sm:$0x3]
        %v503 = vlaneseq
        %v504 = vshrl.u32 %v503, 7
        %v505 = vsub.s32 0, %v504
        %v506 = vrot.slane %v501, %v505
        %v507 = vlaneseq
        %v508 = vshrl.u32 %v507, 7
        %v509 = vsub.s32 1, %v508
        %v510 = vrot.slane %v501, %v509
        %513 = vmatprep.subr.mxu0 %v468
        %514 = vmatpush1.msra.mxu0 %v467
        %515 = vmatprep.subr.mxu0 %v466
        %516 = vmatpush1.msra.mxu0 %v465
        %517 = vmatprep.subr.mxu0 %v464
        %518 = vmatpush1.msra.mxu0 %v463
        %519 = vmatprep.subr.mxu0 %v462
        %520 = vmatpush1.msra.mxu0 %v461
        %521 = vmatprep.subr.mxu0 %v460
        %522 = vmatpush1.msra.mxu0 %v459
        %523 = vmatprep.subr.mxu0 %v458
        %524 = vmatpush1.msra.mxu0 %v457
        %525 = vmatprep.subr.mxu0 %v456
        %526 = vmatpush1.msra.mxu0 %v455
        %527 = vmatprep.subr.mxu0 %v454
        %528 = vmatpush1.msra.mxu0 %v453
        %529 = vmatprep.subr.mxu0 %v452
        %530 = vmatpush1.msra.mxu0 %v451
        %531 = vmatprep.subr.mxu0 %v450
        %532 = vmatpush1.msra.mxu0 %v449
        %533 = vmatprep.subr.mxu0 %v448
        %534 = vmatpush1.msra.mxu0 %v447
        %535 = vmatprep.subr.mxu0 %v446
        %536 = vmatpush1.msra.mxu0 %v445
        %537 = vmatprep.subr.mxu0 %v444
        %538 = vmatpush1.msra.mxu0 %v443
        %539 = vmatprep.subr.mxu0 %v442
        %540 = vmatpush1.msra.mxu0 %v441
        %541 = vmatprep.subr.mxu0 %v440
        %542 = vmatpush1.msra.mxu0 %v439
        %543 = vmatprep.subr.mxu0 %v438
        %544 = vmatpush1.msra.mxu0 %v437
        %545 = vmatprep.subr.mxu0 %v500
        %546 = vmatpush2.msra.mxu0 %v499
        %547 = vmatprep.subr.mxu0 %v498
        %548 = vmatpush2.msra.mxu0 %v497
        %549 = vmatprep.subr.mxu0 %v496
        %550 = vmatpush2.msra.mxu0 %v495
        %551 = vmatprep.subr.mxu0 %v494
        %552 = vmatpush2.msra.mxu0 %v493
        %553 = vmatprep.subr.mxu0 %v492
        %554 = vmatpush2.msra.mxu0 %v491
        %555 = vmatprep.subr.mxu0 %v490
        %556 = vmatpush2.msra.mxu0 %v489
        %557 = vmatprep.subr.mxu0 %v488
        %558 = vmatpush2.msra.mxu0 %v487
        %559 = vmatprep.subr.mxu0 %v486
        %560 = vmatpush2.msra.mxu0 %v485
        %561 = vmatprep.subr.mxu0 %v484
        %562 = vmatpush2.msra.mxu0 %v483
        %563 = vmatprep.subr.mxu0 %v482
        %564 = vmatpush2.msra.mxu0 %v481
        %565 = vmatprep.subr.mxu0 %v480
        %566 = vmatpush2.msra.mxu0 %v479
        %567 = vmatprep.subr.mxu0 %v478
        %568 = vmatpush2.msra.mxu0 %v477
        %569 = vmatprep.subr.mxu0 %v476
        %570 = vmatpush2.msra.mxu0 %v475
        %571 = vmatprep.subr.mxu0 %v474
        %572 = vmatpush2.msra.mxu0 %v473
        %573 = vmatprep.subr.mxu0 %v472
        %574 = vmatpush2.msra.mxu0 %v471
        %575 = vmatprep.subr.mxu0 %v470
        %576 = vmatpush2.msra.mxu0 %v469
        %577 = vmatprep.mubr.f32.mxu0 %v326
        %578 = vmatmul.mubr.f32.gmra.mxu0 %v325
        %v579 = vpop.f32.mrf.mxu0
        %v580 = vadd.f32 %v506, %v579
        %v581 = vpop.f32.mrf.mxu0
        %v582 = vadd.f32 %v510, %v581
        %583 = vdwg.mxu0
        %v584 = vld [vmem:[%s3] sm:$0x1]
        %v586 = vlaneseq
        %v587 = vshrl.u32 %v586, 7
        %v588 = vsub.s32 0, %v587
        %v589 = vrot.slane %v584, %v588
        %v591 = vmul.f32 %v436, %v589
        %592 = vadd.xlane.f32.xlu0 %v591
        %v593 = vpop.xlane.xlu0 %592
        %s594 = sld [smem:[#allocation2]]
        %v595 = vstv %s594
        %v596 = vadd.f32 %v593, %v595
        %v597 = vxor.u32 %v596, 2147483648
        %v598 = vmul.f32 %v597, 1.442695
        %v599 = vpow.pop %v598
        %v600 = vadd.f32 %v599, 1.0
        %v601 = vrcp.pop %v600
        %v602 = vmul.f32 1.0, %v601
        %v603 = vmul.f32 %v580, %v602
        %v604 = vmul.f32 %v582, %v602
        %v605 = vadd.f32 %v325, %v603
        %v606 = vadd.f32 %v326, %v604
        %607 = vst [vmem:[%s324] sm:$0xff] %v605
        %608 = vst [vmem:[%s324 + $0x8] sm:$0xff] %v606
        %s609 = sand.u32 %s186, 1
        %s610 = scalar_lea.sflag [#allocation5], %s609
        %s611 = sand.u32 %s186, 1
        %s612 = smul.addr %s611, 16
        %s613 = scalar_lea.vmem [#allocation9], %s612
        // Predicated region
        $region61: #{tpu_custom_call.1} parent=47 // pred_check
          %p614 = pneg %p196
        $region62: #{tpu_custom_call.1} parent=47 // pred_check_branch
          %616 = sbr.rel (%p614) target = $region64
        $region63: #{tpu_custom_call.1} parent=47 // pred_region
          %s618 = ssub.s32 256, 256
          %619 = vsyncadd %s610, %s618
          %s620 = smul.addr %s26, 2
          %s621 = smul.addr %s620, 128
          %s622 = scalar_lea.hbm %s7, %s621
          %s624 = sshll.u32 %s613, 4
          %s625 = int_to_ptr.vmem [resolvable:$true] %s624
          %627 = dma.vmem_to_hbm [thread:$0]  %s625, 256, %s622, %s610
        $region64: #{tpu_custom_call.1} parent=47 // pred_fallthru
          _
      $region48: #{tpu_custom_call.1} parent=5 // pred_fallthru
        _
      %p628 = scmp.le.s32.totalorder 2, %s21
      // Predicated region
      $region65: #{tpu_custom_call.1} parent=5 // pred_check
        %p629 = pneg %p628
      $region66: #{tpu_custom_call.1} parent=5 // pred_check_branch
        %631 = sbr.rel (%p629) target = $region68
      $region67: #{tpu_custom_call.1} parent=5 // pred_region
        %s632 = ssub.s32 %s21, 2
        // Predicated region
        $region69: #{tpu_custom_call.1} parent=67 // pred_check
          %p633 = pneg %p202
        $region70: #{tpu_custom_call.1} parent=67 // pred_check_branch
          %635 = sbr.rel (%p633) target = $region72
        $region71: #{tpu_custom_call.1} parent=67 // pred_region
          %s636 = sand.u32 %s187, 1
          %s637 = scalar_lea.sflag [#allocation5], %s636
          %s638 = sand.u32 %s187, 1
          %s639 = smul.addr %s638, 16
          %s640 = scalar_lea.vmem [#allocation9], %s639
          %641 = dma.done %s637, 256
        $region72: #{tpu_custom_call.1} parent=67 // pred_fallthru
          _
      $region68: #{tpu_custom_call.1} parent=5 // pred_fallthru
        _
    $region6: #{tpu_custom_call.1} parent=1 // loop_footer
      %s25 = sadd.s32 1, %s21
    $region7: #{tpu_custom_call.1} parent=1 // loop_footer_branch
      %20 = sbr.rel target = $region3
    $region8: #{tpu_custom_call.1} parent=1 // loop_exit
      _
    %642 = vsyncpa [#allocation4], 1
    %s643 = scalar_lea.sflag [#allocation4], 1
    %644 = vsyncpa %s643, 1
    %645 = vsyncpa [#allocation7], 1
    %646 = vsyncpa [#allocation5], 1
    %s647 = scalar_lea.sflag [#allocation5], 1
    %648 = vsyncpa %s647, 1

// kernel: tpu_custom_call.1
$region0: #{tpu_custom_call.1}
  #allocation0 [shape = 'u32[]', space=smem, size = 0x4, offset = 0x4, fixed_abs, tag = 'smem constant byte address 0x4 - core index']
  #allocation1 [shape = 'u32[144,128]{1,0:T(1,128)}', space=vmem, size = 0x12000, scoped, tag = 'internal scratch']
  #allocation2 [shape = 'f32[1]{0:T(128)S(6)}', space=smem, size = 0x200, scoped, tag = 'scoped memory for tpu_custom_call.1']
  %s0 = inlined_call_operand.hbm [shape: f32[16,256], index: 0, kind: input, shape index: {}]
  %s1 = inlined_call_operand.hbm [shape: f32[256,128], index: 1, kind: input, shape index: {}]
  %s2 = inlined_call_operand.vmem [shape: f32[1,128], index: 2, kind: input, shape index: {}]
  %s3 = inlined_call_operand.vmem [shape: f32[1,128], index: 3, kind: input, shape index: {}]
  %s4 = inlined_call_operand.<no memory space> [shape: f32[1], index: 4, kind: input, shape index: {}]
  %s5 = inlined_call_operand.hbm [shape: f32[256,256], index: 5, kind: input, shape index: {}]
  %s6 = inlined_call_operand.vmem [shape: f32[1,256], index: 6, kind: input, shape index: {}]
  %s7 = inlined_call_operand.hbm [shape: f32[16,256], index: 7, kind: output, shape index: {}]
  %s8 = sld [smem:[#allocation0]]
  $region73: #{tpu_custom_call.1} parent=0
    _
  %s10 = ssub.s32 1, %s8
  %s11 = scalar_select 0, %s10, %s8
  %12 = sst [smem:[#allocation2]] %s4
  $region1: #{tpu_custom_call.1} parent=0
    #allocation3 [shape = 'u8[16384]{0}', space=vmem, size = 0x4000, scoped, tag = 'input window, operand 0']
    #allocation4 [shape = 's32[2]{0}', space=sflag, size = 0x8, scoped, tag = 'scoped memory for tpu_custom_call.1']
    #allocation5 [shape = 's32[2]{0}', space=sflag, size = 0x8, scoped, tag = 'scoped memory for tpu_custom_call.1']
    #allocation6 [shape = 'u8[131072]{0}', space=vmem, size = 0x20000, scoped, tag = 'input window, operand 1, single buffered']
    #allocation7 [shape = 's32[1]{0}', space=sflag, size = 0x4, scoped, tag = 'scoped memory for tpu_custom_call.1']
    #allocation8 [shape = 'u8[262144]{0}', space=vmem, size = 0x40000, scoped, tag = 'input window, operand 5, single buffered']
    #allocation9 [shape = 'u8[16384]{0}', space=vmem, size = 0x4000, scoped, tag = 'output window, operand 0']
    %13 = vsyncpa [#allocation4], 0
    %s14 = scalar_lea.sflag [#allocation4], 1
    %15 = vsyncpa %s14, 0
    %16 = vsyncpa [#allocation7], 0
    %17 = vsyncpa [#allocation5], 0
    %s18 = scalar_lea.sflag [#allocation5], 1
    %19 = vsyncpa %s18, 0
    loop: start=0, step=1, limit=4
    $region2: #{tpu_custom_call.1} parent=1 // loop_pre_header
      _
    $region3: #{tpu_custom_call.1} parent=1 // loop_header
      %s21 = sphi 0, %s25
      %p22 = scmp.ge.s32.totalorder %s21, 4
      %s31 = sphi 0, %s33
      %s34 = sphi 0, %s31
      %s35 = sphi 0, %s34
      %s51 = sphi 0, %s35
      %s55 = sphi 0, %s55
      %s57 = sphi 0, %s55
      %s58 = sphi 0, %s57
      %s72 = sphi 0, %s58
      %s76 = sphi 0, %s76
      %s78 = sphi 0, %s76
      %s79 = sphi 0, %s78
      %s93 = sphi 0, %s79
      %s97 = sphi 0, %s97
      %s99 = sphi 0, %s97
      %s100 = sphi 0, %s99
      %s114 = sphi 0, %s100
      %s118 = sphi 0, %s118
      %s120 = sphi 0, %s118
      %s121 = sphi 0, %s120
      %s135 = sphi 0, %s121
      %s139 = sphi 0, %s139
      %s141 = sphi 0, %s139
      %s142 = sphi 0, %s141
      %s156 = sphi 0, %s142
      %s160 = sphi 0, %s160
      %s162 = sphi 0, %s160
      %s163 = sphi 0, %s162
      %s177 = sphi 0, %s163
      %s183 = sphi 0, %s185
      %s186 = sphi 0, %s183
      %s187 = sphi 0, %s186
      %s203 = sphi 0, %s187
    $region4: #{tpu_custom_call.1} parent=1 // loop_header_branch
      %24 = sbr.rel (%p22) target = $region8
    $region5: #{tpu_custom_call.1} parent=1 // loop_body
      %s26 = ssub.s32 %s21, 1
      %s27 = ssub.s32 %s21, 2
      %s28 = sadd.s32 %s21, 1
      %s29 = ssub.s32 %s21, %s28
      %p30 = scmp.eq.s32.totalorder %s29, 0
      %s32 = sadd.s32 %s31, 1
      %s33 = scalar_select %p30, %s31, %s32
      %p36 = pneg %p30
      %p37 = scmp.eq.s32.totalorder %s21, 1
      %p38 = por %p36, %p37
      %p39 = scmp.ne.s32.totalorder %s31, %s34
      %p40 = scmp.eq.s32.totalorder %s21, 0
      %p41 = por %p39, %p40
      %p42 = scmp.ne.s32.totalorder %s31, %s34
      %p43 = scmp.eq.s32.totalorder %s26, 1
      %p44 = por %p42, %p43
      %p45 = scmp.ne.s32.totalorder %s34, %s35
      %p46 = scmp.eq.s32.totalorder %s26, 0
      %p47 = por %p45, %p46
      %p48 = scmp.ne.s32.totalorder %s34, %s35
      %p49 = scmp.eq.s32.totalorder %s27, 1
      %p50 = por %p48, %p49
      %p52 = scmp.ne.s32.totalorder %s35, %s51
      %p53 = scmp.eq.s32.totalorder %s27, 0
      %p54 = por %p52, %p53
      %s56 = sadd.s32 %s55, 1
      %p59 = scmp.eq.s32.totalorder %s21, 1
      %p60 = scmp.ne.s32.totalorder %s55, %s57
      %p61 = scmp.eq.s32.totalorder %s21, 0
      %p62 = por %p60, %p61
      %p63 = scmp.ne.s32.totalorder %s55, %s57
      %p64 = scmp.eq.s32.totalorder %s26, 1
      %p65 = por %p63, %p64
      %p66 = scmp.ne.s32.totalorder %s57, %s58
      %p67 = scmp.eq.s32.totalorder %s26, 0
      %p68 = por %p66, %p67
      %p69 = scmp.ne.s32.totalorder %s57, %s58
      %p70 = scmp.eq.s32.totalorder %s27, 1
      %p71 = por %p69, %p70
      %p73 = scmp.ne.s32.totalorder %s58, %s72
      %p74 = scmp.eq.s32.totalorder %s27, 0
      %p75 = por %p73, %p74
      %s77 = sadd.s32 %s76, 1
      %p80 = scmp.eq.s32.totalorder %s21, 1
      %p81 = scmp.ne.s32.totalorder %s76, %s78
      %p82 = scmp.eq.s32.totalorder %s21, 0
      %p83 = por %p81, %p82
      %p84 = scmp.ne.s32.totalorder %s76, %s78
      %p85 = scmp.eq.s32.totalorder %s26, 1
      %p86 = por %p84, %p85
      %p87 = scmp.ne.s32.totalorder %s78, %s79
      %p88 = scmp.eq.s32.totalorder %s26, 0
      %p89 = por %p87, %p88
      %p90 = scmp.ne.s32.totalorder %s78, %s79
      %p91 = scmp.eq.s32.totalorder %s27, 1
      %p92 = por %p90, %p91
      %p94 = scmp.ne.s32.totalorder %s79, %s93
      %p95 = scmp.eq.s32.totalorder %s27, 0
      %p96 = por %p94, %p95
      %s98 = sadd.s32 %s97, 1
      %p101 = scmp.eq.s32.totalorder %s21, 1
      %p102 = scmp.ne.s32.totalorder %s97, %s99
      %p103 = scmp.eq.s32.totalorder %s21, 0
      %p104 = por %p102, %p103
      %p105 = scmp.ne.s32.totalorder %s97, %s99
      %p106 = scmp.eq.s32.totalorder %s26, 1
      %p107 = por %p105, %p106
      %p108 = scmp.ne.s32.totalorder %s99, %s100
      %p109 = scmp.eq.s32.totalorder %s26, 0
      %p110 = por %p108, %p109
      %p111 = scmp.ne.s32.totalorder %s99, %s100
      %p112 = scmp.eq.s32.totalorder %s27, 1
      %p113 = por %p111, %p112
      %p115 = scmp.ne.s32.totalorder %s100, %s114
      %p116 = scmp.eq.s32.totalorder %s27, 0
      %p117 = por %p115, %p116
      %s119 = sadd.s32 %s118, 1
      %p122 = scmp.eq.s32.totalorder %s21, 1
      %p123 = scmp.ne.s32.totalorder %s118, %s120
      %p124 = scmp.eq.s32.totalorder %s21, 0
      %p125 = por %p123, %p124
      %p126 = scmp.ne.s32.totalorder %s118, %s120
      %p127 = scmp.eq.s32.totalorder %s26, 1
      %p128 = por %p126, %p127
      %p129 = scmp.ne.s32.totalorder %s120, %s121
      %p130 = scmp.eq.s32.totalorder %s26, 0
      %p131 = por %p129, %p130
      %p132 = scmp.ne.s32.totalorder %s120, %s121
      %p133 = scmp.eq.s32.totalorder %s27, 1
      %p134 = por %p132, %p133
      %p136 = scmp.ne.s32.totalorder %s121, %s135
      %p137 = scmp.eq.s32.totalorder %s27, 0
      %p138 = por %p136, %p137
      %s140 = sadd.s32 %s139, 1
      %p143 = scmp.eq.s32.totalorder %s21, 1
      %p144 = scmp.ne.s32.totalorder %s139, %s141
      %p145 = scmp.eq.s32.totalorder %s21, 0
      %p146 = por %p144, %p145
      %p147 = scmp.ne.s32.totalorder %s139, %s141
      %p148 = scmp.eq.s32.totalorder %s26, 1
      %p149 = por %p147, %p148
      %p150 = scmp.ne.s32.totalorder %s141, %s142
      %p151 = scmp.eq.s32.totalorder %s26, 0
      %p152 = por %p150, %p151
      %p153 = scmp.ne.s32.totalorder %s141, %s142
      %p154 = scmp.eq.s32.totalorder %s27, 1
      %p155 = por %p153, %p154
      %p157 = scmp.ne.s32.totalorder %s142, %s156
      %p158 = scmp.eq.s32.totalorder %s27, 0
      %p159 = por %p157, %p158
      %s161 = sadd.s32 %s160, 1
      %p164 = scmp.eq.s32.totalorder %s21, 1
      %p165 = scmp.ne.s32.totalorder %s160, %s162
      %p166 = scmp.eq.s32.totalorder %s21, 0
      %p167 = por %p165, %p166
      %p168 = scmp.ne.s32.totalorder %s160, %s162
      %p169 = scmp.eq.s32.totalorder %s26, 1
      %p170 = por %p168, %p169
      %p171 = scmp.ne.s32.totalorder %s162, %s163
      %p172 = scmp.eq.s32.totalorder %s26, 0
      %p173 = por %p171, %p172
      %p174 = scmp.ne.s32.totalorder %s162, %s163
      %p175 = scmp.eq.s32.totalorder %s27, 1
      %p176 = por %p174, %p175
      %p178 = scmp.ne.s32.totalorder %s163, %s177
      %p179 = scmp.eq.s32.totalorder %s27, 0
      %p180 = por %p178, %p179
      %s181 = ssub.s32 %s21, %s28
      %p182 = scmp.eq.s32.totalorder %s181, 0
      %s184 = sadd.s32 %s183, 1
      %s185 = scalar_select %p182, %s183, %s184
      %p188 = pneg %p182
      %p189 = scmp.eq.s32.totalorder %s21, 1
      %p190 = por %p188, %p189
      %p191 = scmp.ne.s32.totalorder %s183, %s186
      %p192 = scmp.eq.s32.totalorder %s21, 0
      %p193 = por %p191, %p192
      %p194 = scmp.ne.s32.totalorder %s183, %s186
      %p195 = scmp.eq.s32.totalorder %s26, 1
      %p196 = por %p194, %p195
      %p197 = scmp.ne.s32.totalorder %s186, %s187
      %p198 = scmp.eq.s32.totalorder %s26, 0
      %p199 = por %p197, %p198
      %p200 = scmp.ne.s32.totalorder %s186, %s187
      %p201 = scmp.eq.s32.totalorder %s27, 1
      %p202 = por %p200, %p201
      %p204 = scmp.ne.s32.totalorder %s187, %s203
      %p205 = scmp.eq.s32.totalorder %s27, 0
      %p206 = por %p204, %p205
      %p207 = scmp.le.s32.totalorder 1, %s21
      %p208 = scmp.lt.s32.totalorder %s21, 3
      %p209 = pnand %p207, %p208
      %p210 = pneg %p209
      // Predicated region
      $region9: #{tpu_custom_call.1} parent=5 // pred_check
        _
      $region10: #{tpu_custom_call.1} parent=5 // pred_check_branch
        %212 = sbr.rel (%p209) target = $region12
      $region11: #{tpu_custom_call.1} parent=5 // pred_region
        %s213 = ssub.s32 %s21, 1
        // Predicated region
        $region13: #{tpu_custom_call.1} parent=11 // pred_check
          %p214 = pneg %p68
        $region14: #{tpu_custom_call.1} parent=11 // pred_check_branch
          %216 = sbr.rel (%p214) target = $region16
        $region15: #{tpu_custom_call.1} parent=11 // pred_region
          %s218 = ssub.s32 4096, 4096
          %219 = vsyncadd [#allocation7], %s218
          %s220 = sshll.u32 [#allocation6], 4
          %s221 = int_to_ptr.vmem [resolvable:$true] %s220
          %226 = dma.hbm_to_vmem [thread:$0]  %s1, 4096, %s221, [#allocation7], 128, 128, 8
        $region16: #{tpu_custom_call.1} parent=11 // pred_fallthru
          _
        // Predicated region
        $region17: #{tpu_custom_call.1} parent=11 // pred_check
          %p227 = pneg %p89
        $region18: #{tpu_custom_call.1} parent=11 // pred_check_branch
          %229 = sbr.rel (%p227) target = $region20
        $region19: #{tpu_custom_call.1} parent=11 // pred_region
          _
        $region20: #{tpu_custom_call.1} parent=11 // pred_fallthru
          _
        // Predicated region
        $region21: #{tpu_custom_call.1} parent=11 // pred_check
          %p230 = pneg %p110
        $region22: #{tpu_custom_call.1} parent=11 // pred_check_branch
          %232 = sbr.rel (%p230) target = $region24
        $region23: #{tpu_custom_call.1} parent=11 // pred_region
          _
        $region24: #{tpu_custom_call.1} parent=11 // pred_fallthru
          _
        // Predicated region
        $region25: #{tpu_custom_call.1} parent=11 // pred_check
          %p233 = pneg %p131
        $region26: #{tpu_custom_call.1} parent=11 // pred_check_branch
          %235 = sbr.rel (%p233) target = $region28
        $region27: #{tpu_custom_call.1} parent=11 // pred_region
          _
        $region28: #{tpu_custom_call.1} parent=11 // pred_fallthru
          _
        // Predicated region
        $region29: #{tpu_custom_call.1} parent=11 // pred_check
          %p236 = pneg %p152
        $region30: #{tpu_custom_call.1} parent=11 // pred_check_branch
          %238 = sbr.rel (%p236) target = $region32
        $region31: #{tpu_custom_call.1} parent=11 // pred_region
          %s240 = ssub.s32 8192, 8192
          %241 = vsyncadd [#allocation7], %s240
          %s242 = sshll.u32 [#allocation8], 4
          %s243 = int_to_ptr.vmem [resolvable:$true] %s242
          %248 = dma.hbm_to_vmem [thread:$0]  %s5, 8192, %s243, [#allocation7], 256, 256, 16
        $region32: #{tpu_custom_call.1} parent=11 // pred_fallthru
          _
        // Predicated region
        $region33: #{tpu_custom_call.1} parent=11 // pred_check
          %p249 = pneg %p173
        $region34: #{tpu_custom_call.1} parent=11 // pred_check_branch
          %251 = sbr.rel (%p249) target = $region36
        $region35: #{tpu_custom_call.1} parent=11 // pred_region
          _
        $region36: #{tpu_custom_call.1} parent=11 // pred_fallthru
          _
      $region12: #{tpu_custom_call.1} parent=5 // pred_fallthru
        _
      %p252 = scmp.lt.s32.totalorder %s21, 2
      // Predicated region
      $region37: #{tpu_custom_call.1} parent=5 // pred_check
        %p253 = pneg %p252
      $region38: #{tpu_custom_call.1} parent=5 // pred_check_branch
        %255 = sbr.rel (%p253) target = $region40
      $region39: #{tpu_custom_call.1} parent=5 // pred_region
        // Predicated region
        $region41: #{tpu_custom_call.1} parent=39 // pred_check
          %p256 = pneg %p41
        $region42: #{tpu_custom_call.1} parent=39 // pred_check_branch
          %258 = sbr.rel (%p256) target = $region44
        $region43: #{tpu_custom_call.1} parent=39 // pred_region
          %s259 = sand.u32 %s31, 1
          %s260 = scalar_lea.sflag [#allocation4], %s259
          %s261 = sand.u32 %s31, 1
          %s262 = smul.addr %s261, 16
          %s263 = scalar_lea.vmem [#allocation3], %s262
          %s265 = ssub.s32 256, 256
          %266 = vsyncadd %s260, %s265
          %s267 = smul.addr %s21, 2
          %s268 = smul.addr %s267, 128
          %s269 = scalar_lea.hbm %s0, %s268
          %s271 = sshll.u32 %s263, 4
          %s272 = int_to_ptr.vmem [resolvable:$true] %s271
          %274 = dma.hbm_to_vmem [thread:$0]  %s269, 256, %s272, %s260
        $region44: #{tpu_custom_call.1} parent=39 // pred_fallthru
          _
      $region40: #{tpu_custom_call.1} parent=5 // pred_fallthru
        _
      %p275 = scmp.le.s32.totalorder 1, %s21
      %p276 = scmp.lt.s32.totalorder %s21, 3
      %p277 = pnand %p275, %p276
      %p278 = pneg %p277
      // Predicated region
      $region45: #{tpu_custom_call.1} parent=5 // pred_check
        _
      $region46: #{tpu_custom_call.1} parent=5 // pred_check_branch
        %280 = sbr.rel (%p277) target = $region48
      $region47: #{tpu_custom_call.1} parent=5 // pred_region
        %s281 = ssub.s32 %s21, 1
        %s282 = sand.u32 %s34, 1
        %s283 = scalar_lea.sflag [#allocation4], %s282
        %s284 = sand.u32 %s34, 1
        %s285 = smul.addr %s284, 16
        %s286 = scalar_lea.vmem [#allocation3], %s285
        // Predicated region
        $region49: #{tpu_custom_call.1} parent=47 // pred_check
          %p287 = pneg %p47
        $region50: #{tpu_custom_call.1} parent=47 // pred_check_branch
          %289 = sbr.rel (%p287) target = $region52
        $region51: #{tpu_custom_call.1} parent=47 // pred_region
          %290 = dma.done %s283, 256
        $region52: #{tpu_custom_call.1} parent=47 // pred_fallthru
          _
        // Predicated region
        $region53: #{tpu_custom_call.1} parent=47 // pred_check
          %p291 = pneg %p68
        $region54: #{tpu_custom_call.1} parent=47 // pred_check_branch
          %293 = sbr.rel (%p291) target = $region56
        $region55: #{tpu_custom_call.1} parent=47 // pred_region
          %294 = dma.done [#allocation7], 4096
        $region56: #{tpu_custom_call.1} parent=47 // pred_fallthru
          _
        // Predicated region
        $region57: #{tpu_custom_call.1} parent=47 // pred_check
          %p295 = pneg %p152
        $region58: #{tpu_custom_call.1} parent=47 // pred_check_branch
          %297 = sbr.rel (%p295) target = $region60
        $region59: #{tpu_custom_call.1} parent=47 // pred_region
          %298 = dma.done [#allocation7], 8192
        $region60: #{tpu_custom_call.1} parent=47 // pred_fallthru
          _
        %s299 = sand.u32 %s34, 1
        %s300 = scalar_lea.sflag [#allocation4], %s299
        %s301 = sand.u32 %s34, 1
        %s302 = smul.addr %s301, 16
        %s303 = scalar_lea.vmem [#allocation3], %s302
        %p304 = pneg %p47
        %p305 = pneg %p44
        %p306 = pneg %p68
        %p307 = pneg %p65
        %p308 = pneg %p89
        %p309 = pneg %p86
        %p310 = pneg %p110
        %p311 = pneg %p107
        %p312 = pneg %p131
        %p313 = pneg %p128
        %p314 = pneg %p152
        %p315 = pneg %p149
        %p316 = pneg %p173
        %p317 = pneg %p170
        %p318 = pneg %p199
        %p319 = pneg %p196
        %s320 = sand.u32 %s186, 1
        %s321 = scalar_lea.sflag [#allocation5], %s320
        %s322 = sand.u32 %s186, 1
        %s323 = smul.addr %s322, 16
        %s324 = scalar_lea.vmem [#allocation9], %s323
        %v325 = vld [vmem:[%s286] sm:$0xff]
        %v326 = vld [vmem:[%s286 + $0x8] sm:$0xff]
        %v327 = vld [vmem:[#allocation6] sm:$0xff]
        %v328 = vld [vmem:[#allocation6 + $0x8] sm:$0xff]
        %v329 = vld [vmem:[#allocation6 + $0x10] sm:$0xff]
        %v330 = vld [vmem:[#allocation6 + $0x18] sm:$0xff]
        %v331 = vld [vmem:[#allocation6 + $0x20] sm:$0xff]
        %v332 = vld [vmem:[#allocation6 + $0x28] sm:$0xff]
        %v333 = vld [vmem:[#allocation6 + $0x30] sm:$0xff]
        %v334 = vld [vmem:[#allocation6 + $0x38] sm:$0xff]
        %v335 = vld [vmem:[#allocation6 + $0x40] sm:$0xff]
        %v336 = vld [vmem:[#allocation6 + $0x48] sm:$0xff]
        %v337 = vld [vmem:[#allocation6 + $0x50] sm:$0xff]
        %v338 = vld [vmem:[#allocation6 + $0x58] sm:$0xff]
        %v339 = vld [vmem:[#allocation6 + $0x60] sm:$0xff]
        %v340 = vld [vmem:[#allocation6 + $0x68] sm:$0xff]
        %v341 = vld [vmem:[#allocation6 + $0x70] sm:$0xff]
        %v342 = vld [vmem:[#allocation6 + $0x78] sm:$0xff]
        %v343 = vld [vmem:[#allocation6 + $0x80] sm:$0xff]
        %v344 = vld [vmem:[#allocation6 + $0x88] sm:$0xff]
        %v345 = vld [vmem:[#allocation6 + $0x90] sm:$0xff]
        %v346 = vld [vmem:[#allocation6 + $0x98] sm:$0xff]
        %v347 = vld [vmem:[#allocation6 + $0xa0] sm:$0xff]
        %v348 = vld [vmem:[#allocation6 + $0xa8] sm:$0xff]
        %v349 = vld [vmem:[#allocation6 + $0xb0] sm:$0xff]
        %v350 = vld [vmem:[#allocation6 + $0xb8] sm:$0xff]
        %v351 = vld [vmem:[#allocation6 + $0xc0] sm:$0xff]
        %v352 = vld [vmem:[#allocation6 + $0xc8] sm:$0xff]
        %v353 = vld [vmem:[#allocation6 + $0xd0] sm:$0xff]
        %v354 = vld [vmem:[#allocation6 + $0xd8] sm:$0xff]
        %v355 = vld [vmem:[#allocation6 + $0xe0] sm:$0xff]
        %v356 = vld [vmem:[#allocation6 + $0xe8] sm:$0xff]
        %v357 = vld [vmem:[#allocation6 + $0xf0] sm:$0xff]
        %v358 = vld [vmem:[#allocation6 + $0xf8] sm:$0xff]
        %v359 = vld [vmem:[%s2] sm:$0x1]
        %v361 = vlaneseq
        %v362 = vshrl.u32 %v361, 7
        %v363 = vsub.s32 0, %v362
        %v364 = vrot.slane %v359, %v363
        %366 = vmatprep.subr.mxu0 0.0
        %367 = vmatpush1.msra.mxu0 %v342
        %368 = vmatprep.subr.mxu0 0.0
        %369 = vmatpush1.msra.mxu0 %v341
        %370 = vmatprep.subr.mxu0 0.0
        %371 = vmatpush1.msra.mxu0 %v340
        %372 = vmatprep.subr.mxu0 0.0
        %373 = vmatpush1.msra.mxu0 %v339
        %374 = vmatprep.subr.mxu0 0.0
        %375 = vmatpush1.msra.mxu0 %v338
        %376 = vmatprep.subr.mxu0 0.0
        %377 = vmatpush1.msra.mxu0 %v337
        %378 = vmatprep.subr.mxu0 0.0
        %379 = vmatpush1.msra.mxu0 %v336
        %380 = vmatprep.subr.mxu0 0.0
        %381 = vmatpush1.msra.mxu0 %v335
        %382 = vmatprep.subr.mxu0 0.0
        %383 = vmatpush1.msra.mxu0 %v334
        %384 = vmatprep.subr.mxu0 0.0
        %385 = vmatpush1.msra.mxu0 %v333
        %386 = vmatprep.subr.mxu0 0.0
        %387 = vmatpush1.msra.mxu0 %v332
        %388 = vmatprep.subr.mxu0 0.0
        %389 = vmatpush1.msra.mxu0 %v331
        %390 = vmatprep.subr.mxu0 0.0
        %391 = vmatpush1.msra.mxu0 %v330
        %392 = vmatprep.subr.mxu0 0.0
        %393 = vmatpush1.msra.mxu0 %v329
        %394 = vmatprep.subr.mxu0 0.0
        %395 = vmatpush1.msra.mxu0 %v328
        %396 = vmatprep.subr.mxu0 0.0
        %397 = vmatpush1.msra.mxu0 %v327
        %398 = vmatprep.subr.mxu0 0.0
        %399 = vmatpush2.msra.mxu0 %v358
        %400 = vmatprep.subr.mxu0 0.0
        %401 = vmatpush2.msra.mxu0 %v357
        %402 = vmatprep.subr.mxu0 0.0
        %403 = vmatpush2.msra.mxu0 %v356
        %404 = vmatprep.subr.mxu0 0.0
        %405 = vmatpush2.msra.mxu0 %v355
        %406 = vmatprep.subr.mxu0 0.0
        %407 = vmatpush2.msra.mxu0 %v354
        %408 = vmatprep.subr.mxu0 0.0
        %409 = vmatpush2.msra.mxu0 %v353
        %410 = vmatprep.subr.mxu0 0.0
        %411 = vmatpush2.msra.mxu0 %v352
        %412 = vmatprep.subr.mxu0 0.0
        %413 = vmatpush2.msra.mxu0 %v351
        %414 = vmatprep.subr.mxu0 0.0
        %415 = vmatpush2.msra.mxu0 %v350
        %416 = vmatprep.subr.mxu0 0.0
        %417 = vmatpush2.msra.mxu0 %v349
        %418 = vmatprep.subr.mxu0 0.0
        %419 = vmatpush2.msra.mxu0 %v348
        %420 = vmatprep.subr.mxu0 0.0
        %421 = vmatpush2.msra.mxu0 %v347
        %422 = vmatprep.subr.mxu0 0.0
        %423 = vmatpush2.msra.mxu0 %v346
        %424 = vmatprep.subr.mxu0 0.0
        %425 = vmatpush2.msra.mxu0 %v345
        %426 = vmatprep.subr.mxu0 0.0
        %427 = vmatpush2.msra.mxu0 %v344
        %428 = vmatprep.subr.mxu0 0.0
        %429 = vmatpush2.msra.mxu0 %v343
        %430 = vmatprep.mubr.f32.mxu0 %v326
        %431 = vmatmul.mubr.f32.gmra.mxu0 %v325
        %v432 = vpop.f32.mrf.mxu0
        %v433 = vadd.f32 %v364, %v432
        %v434 = vpop.f32.mrf.mxu0
        %435 = vdwg.mxu0
        %v436 = vtanh.pop %v433
        %v437 = vld [vmem:[#allocation8] sm:$0xff]
        %v438 = vld [vmem:[#allocation8 + $0x8] sm:$0xff]
        %v439 = vld [vmem:[#allocation8 + $0x10] sm:$0xff]
        %v440 = vld [vmem:[#allocation8 + $0x18] sm:$0xff]
        %v441 = vld [vmem:[#allocation8 + $0x20] sm:$0xff]
        %v442 = vld [vmem:[#allocation8 + $0x28] sm:$0xff]
        %v443 = vld [vmem:[#allocation8 + $0x30] sm:$0xff]
        %v444 = vld [vmem:[#allocation8 + $0x38] sm:$0xff]
        %v445 = vld [vmem:[#allocation8 + $0x40] sm:$0xff]
        %v446 = vld [vmem:[#allocation8 + $0x48] sm:$0xff]
        %v447 = vld [vmem:[#allocation8 + $0x50] sm:$0xff]
        %v448 = vld [vmem:[#allocation8 + $0x58] sm:$0xff]
        %v449 = vld [vmem:[#allocation8 + $0x60] sm:$0xff]
        %v450 = vld [vmem:[#allocation8 + $0x68] sm:$0xff]
        %v451 = vld [vmem:[#allocation8 + $0x70] sm:$0xff]
        %v452 = vld [vmem:[#allocation8 + $0x78] sm:$0xff]
        %v453 = vld [vmem:[#allocation8 + $0x80] sm:$0xff]
        %v454 = vld [vmem:[#allocation8 + $0x88] sm:$0xff]
        %v455 = vld [vmem:[#allocation8 + $0x90] sm:$0xff]
        %v456 = vld [vmem:[#allocation8 + $0x98] sm:$0xff]
        %v457 = vld [vmem:[#allocation8 + $0xa0] sm:$0xff]
        %v458 = vld [vmem:[#allocation8 + $0xa8] sm:$0xff]
        %v459 = vld [vmem:[#allocation8 + $0xb0] sm:$0xff]
        %v460 = vld [vmem:[#allocation8 + $0xb8] sm:$0xff]
        %v461 = vld [vmem:[#allocation8 + $0xc0] sm:$0xff]
        %v462 = vld [vmem:[#allocation8 + $0xc8] sm:$0xff]
        %v463 = vld [vmem:[#allocation8 + $0xd0] sm:$0xff]
        %v464 = vld [vmem:[#allocation8 + $0xd8] sm:$0xff]
        %v465 = vld [vmem:[#allocation8 + $0xe0] sm:$0xff]
        %v466 = vld [vmem:[#allocation8 + $0xe8] sm:$0xff]
        %v467 = vld [vmem:[#allocation8 + $0xf0] sm:$0xff]
        %v468 = vld [vmem:[#allocation8 + $0xf8] sm:$0xff]
        %v469 = vld [vmem:[#allocation8 + $0x100] sm:$0xff]
        %v470 = vld [vmem:[#allocation8 + $0x108] sm:$0xff]
        %v471 = vld [vmem:[#allocation8 + $0x110] sm:$0xff]
        %v472 = vld [vmem:[#allocation8 + $0x118] sm:$0xff]
        %v473 = vld [vmem:[#allocation8 + $0x120] sm:$0xff]
        %v474 = vld [vmem:[#allocation8 + $0x128] sm:$0xff]
        %v475 = vld [vmem:[#allocation8 + $0x130] sm:$0xff]
        %v476 = vld [vmem:[#allocation8 + $0x138] sm:$0xff]
        %v477 = vld [vmem:[#allocation8 + $0x140] sm:$0xff]
        %v478 = vld [vmem:[#allocation8 + $0x148] sm:$0xff]
        %v479 = vld [vmem:[#allocation8 + $0x150] sm:$0xff]
        %v480 = vld [vmem:[#allocation8 + $0x158] sm:$0xff]
        %v481 = vld [vmem:[#allocation8 + $0x160] sm:$0xff]
        %v482 = vld [vmem:[#allocation8 + $0x168] sm:$0xff]
        %v483 = vld [vmem:[#allocation8 + $0x170] sm:$0xff]
        %v484 = vld [vmem:[#allocation8 + $0x178] sm:$0xff]
        %v485 = vld [vmem:[#allocation8 + $0x180] sm:$0xff]
        %v486 = vld [vmem:[#allocation8 + $0x188] sm:$0xff]
        %v487 = vld [vmem:[#allocation8 + $0x190] sm:$0xff]
        %v488 = vld [vmem:[#allocation8 + $0x198] sm:$0xff]
        %v489 = vld [vmem:[#allocation8 + $0x1a0] sm:$0xff]
        %v490 = vld [vmem:[#allocation8 + $0x1a8] sm:$0xff]
        %v491 = vld [vmem:[#allocation8 + $0x1b0] sm:$0xff]
        %v492 = vld [vmem:[#allocation8 + $0x1b8] sm:$0xff]
        %v493 = vld [vmem:[#allocation8 + $0x1c0] sm:$0xff]
        %v494 = vld [vmem:[#allocation8 + $0x1c8] sm:$0xff]
        %v495 = vld [vmem:[#allocation8 + $0x1d0] sm:$0xff]
        %v496 = vld [vmem:[#allocation8 + $0x1d8] sm:$0xff]
        %v497 = vld [vmem:[#allocation8 + $0x1e0] sm:$0xff]
        %v498 = vld [vmem:[#allocation8 + $0x1e8] sm:$0xff]
        %v499 = vld [vmem:[#allocation8 + $0x1f0] sm:$0xff]
        %v500 = vld [vmem:[#allocation8 + $0x1f8] sm:$0xff]
        %v501 = vld [vmem:[%s6] sm:$0x3]
        %v503 = vlaneseq
        %v504 = vshrl.u32 %v503, 7
        %v505 = vsub.s32 0, %v504
        %v506 = vrot.slane %v501, %v505
        %v507 = vlaneseq
        %v508 = vshrl.u32 %v507, 7
        %v509 = vsub.s32 1, %v508
        %v510 = vrot.slane %v501, %v509
        %513 = vmatprep.subr.mxu0 %v468
        %514 = vmatpush1.msra.mxu0 %v467
        %515 = vmatprep.subr.mxu0 %v466
        %516 = vmatpush1.msra.mxu0 %v465
        %517 = vmatprep.subr.mxu0 %v464
        %518 = vmatpush1.msra.mxu0 %v463
        %519 = vmatprep.subr.mxu0 %v462
        %520 = vmatpush1.msra.mxu0 %v461
        %521 = vmatprep.subr.mxu0 %v460
        %522 = vmatpush1.msra.mxu0 %v459
        %523 = vmatprep.subr.mxu0 %v458
        %524 = vmatpush1.msra.mxu0 %v457
        %525 = vmatprep.subr.mxu0 %v456
        %526 = vmatpush1.msra.mxu0 %v455
        %527 = vmatprep.subr.mxu0 %v454
        %528 = vmatpush1.msra.mxu0 %v453
        %529 = vmatprep.subr.mxu0 %v452
        %530 = vmatpush1.msra.mxu0 %v451
        %531 = vmatprep.subr.mxu0 %v450
        %532 = vmatpush1.msra.mxu0 %v449
        %533 = vmatprep.subr.mxu0 %v448
        %534 = vmatpush1.msra.mxu0 %v447
        %535 = vmatprep.subr.mxu0 %v446
        %536 = vmatpush1.msra.mxu0 %v445
        %537 = vmatprep.subr.mxu0 %v444
        %538 = vmatpush1.msra.mxu0 %v443
        %539 = vmatprep.subr.mxu0 %v442
        %540 = vmatpush1.msra.mxu0 %v441
        %541 = vmatprep.subr.mxu0 %v440
        %542 = vmatpush1.msra.mxu0 %v439
        %543 = vmatprep.subr.mxu0 %v438
        %544 = vmatpush1.msra.mxu0 %v437
        %545 = vmatprep.subr.mxu0 %v500
        %546 = vmatpush2.msra.mxu0 %v499
        %547 = vmatprep.subr.mxu0 %v498
        %548 = vmatpush2.msra.mxu0 %v497
        %549 = vmatprep.subr.mxu0 %v496
        %550 = vmatpush2.msra.mxu0 %v495
        %551 = vmatprep.subr.mxu0 %v494
        %552 = vmatpush2.msra.mxu0 %v493
        %553 = vmatprep.subr.mxu0 %v492
        %554 = vmatpush2.msra.mxu0 %v491
        %555 = vmatprep.subr.mxu0 %v490
        %556 = vmatpush2.msra.mxu0 %v489
        %557 = vmatprep.subr.mxu0 %v488
        %558 = vmatpush2.msra.mxu0 %v487
        %559 = vmatprep.subr.mxu0 %v486
        %560 = vmatpush2.msra.mxu0 %v485
        %561 = vmatprep.subr.mxu0 %v484
        %562 = vmatpush2.msra.mxu0 %v483
        %563 = vmatprep.subr.mxu0 %v482
        %564 = vmatpush2.msra.mxu0 %v481
        %565 = vmatprep.subr.mxu0 %v480
        %566 = vmatpush2.msra.mxu0 %v479
        %567 = vmatprep.subr.mxu0 %v478
        %568 = vmatpush2.msra.mxu0 %v477
        %569 = vmatprep.subr.mxu0 %v476
        %570 = vmatpush2.msra.mxu0 %v475
        %571 = vmatprep.subr.mxu0 %v474
        %572 = vmatpush2.msra.mxu0 %v473
        %573 = vmatprep.subr.mxu0 %v472
        %574 = vmatpush2.msra.mxu0 %v471
        %575 = vmatprep.subr.mxu0 %v470
        %576 = vmatpush2.msra.mxu0 %v469
        %577 = vmatprep.mubr.f32.mxu0 %v326
        %578 = vmatmul.mubr.f32.gmra.mxu0 %v325
        %v579 = vpop.f32.mrf.mxu0
        %v580 = vadd.f32 %v506, %v579
        %v581 = vpop.f32.mrf.mxu0
        %v582 = vadd.f32 %v510, %v581
        %583 = vdwg.mxu0
        %v584 = vld [vmem:[%s3] sm:$0x1]
        %v586 = vlaneseq
        %v587 = vshrl.u32 %v586, 7
        %v588 = vsub.s32 0, %v587
        %v589 = vrot.slane %v584, %v588
        %v591 = vmul.f32 %v436, %v589
        %592 = vadd.xlane.f32.xlu0 %v591
        %v593 = vpop.xlane.xlu0 %592
        %s594 = sld [smem:[#allocation2]]
        %v595 = vstv %s594
        %v596 = vadd.f32 %v593, %v595
        %v597 = vxor.u32 %v596, 2147483648
        %v598 = vmul.f32 %v597, 1.442695
        %v599 = vpow.pop %v598
        %v600 = vadd.f32 %v599, 1.0
        %v601 = vrcp.pop %v600
        %v602 = vmul.f32 1.0, %v601
        %v603 = vmul.f32 %v580, %v602
        %v604 = vmul.f32 %v582, %v602
        %v605 = vadd.f32 %v325, %v603
        %v606 = vadd.f32 %v326, %v604
        %607 = vst [vmem:[%s324] sm:$0xff] %v605
        %608 = vst [vmem:[%s324 + $0x8] sm:$0xff] %v606
        %s609 = sand.u32 %s186, 1
        %s610 = scalar_lea.sflag [#allocation5], %s609
        %s611 = sand.u32 %s186, 1
        %s612 = smul.addr %s611, 16
        %s613 = scalar_lea.vmem [#allocation9], %s612
        // Predicated region
        $region61: #{tpu_custom_call.1} parent=47 // pred_check
          %p614 = pneg %p196
        $region62: #{tpu_custom_call.1} parent=47 // pred_check_branch
          %616 = sbr.rel (%p614) target = $region64
        $region63: #{tpu_custom_call.1} parent=47 // pred_region
          %s618 = ssub.s32 256, 256
          %619 = vsyncadd %s610, %s618
          %s620 = smul.addr %s26, 2
          %s621 = smul.addr %s620, 128
          %s622 = scalar_lea.hbm %s7, %s621
          %s624 = sshll.u32 %s613, 4
          %s625 = int_to_ptr.vmem [resolvable:$true] %s624
          %627 = dma.vmem_to_hbm [thread:$0]  %s625, 256, %s622, %s610
        $region64: #{tpu_custom_call.1} parent=47 // pred_fallthru
          _
      $region48: #{tpu_custom_call.1} parent=5 // pred_fallthru
        _
      %p628 = scmp.le.s32.totalorder 2, %s21
      // Predicated region
      $region65: #{tpu_custom_call.1} parent=5 // pred_check
        %p629 = pneg %p628
      $region66: #{tpu_custom_call.1} parent=5 // pred_check_branch
        %631 = sbr.rel (%p629) target = $region68
      $region67: #{tpu_custom_call.1} parent=5 // pred_region
        %s632 = ssub.s32 %s21, 2
        // Predicated region
        $region69: #{tpu_custom_call.1} parent=67 // pred_check
          %p633 = pneg %p202
        $region70: #{tpu_custom_call.1} parent=67 // pred_check_branch
          %635 = sbr.rel (%p633) target = $region72
        $region71: #{tpu_custom_call.1} parent=67 // pred_region
          %s636 = sand.u32 %s187, 1
          %s637 = scalar_lea.sflag [#allocation5], %s636
          %s638 = sand.u32 %s187, 1
          %s639 = smul.addr %s638, 16
          %s640 = scalar_lea.vmem [#allocation9], %s639
          %641 = dma.done %s637, 256
        $region72: #{tpu_custom_call.1} parent=67 // pred_fallthru
          _
      $region68: #{tpu_custom_call.1} parent=5 // pred_fallthru
        _
    $region6: #{tpu_custom_call.1} parent=1 // loop_footer
      %s25 = sadd.s32 1, %s21
    $region7: #{tpu_custom_call.1} parent=1 // loop_footer_branch
      %20 = sbr.rel target = $region3
    $region8: #{tpu_custom_call.1} parent=1 // loop_exit
      _
    %642 = vsyncpa [#allocation4], 1
    %s643 = scalar_lea.sflag [#allocation4], 1
    %644 = vsyncpa %s643, 1
    %645 = vsyncpa [#allocation7], 1
    %646 = vsyncpa [#allocation5], 1
    %s647 = scalar_lea.sflag [#allocation5], 1
    %648 = vsyncpa %s647, 1

</llo_original>
